<compile_context>
chip_gen: v6e
topology: v6e:2x2x1
jax: 0.10.0
libtpu: 0.0.40
codegen_flags: <defaults>
</compile_context>

<pallas_src>
import functools

import jax
import jax.numpy as jnp
from jax.experimental import pallas as pl
from jax.experimental.pallas import tpu as pltpu

FEAT_HIDDEN = 64
DUEL_HIDDEN = 512
LANE = 128
HEAD_CHUNK = 256   # chunk width along the fused adv||value hidden dim (1024)
MIN_TILE = 16      # bf16-output native sublane tile; batch tiles rounded to this


def _round_up(n, m):
    return ((n + m - 1) // m) * m


# --------------------------------------------------------------------------
# Kernel: one batch tile of the fully fused forward pass.
# --------------------------------------------------------------------------
def flat_dqfd_kernel(
    x_ref,                 # (TB, D_in)        f32 observations
    w1_ref, b1_ref,        # (D_in, 64) bf16 / (1, 64)   f32
    w2_ref, b2_ref,        # (64, 64)   bf16 / (1, 64)   f32
    wh_ref, bh_ref,        # (64, 1024) bf16 / (1, 1024) f32   adv||value hidden
    wq_ref, bq_ref,        # (1024,128) bf16 / (1, 128)  f32   pre-centered head
    q_ref,                 # (TB, 128)  bf16  lane-padded Q (only [:, :A] used)
):
    def mm(a, w):
        return jnp.dot(a, w, preferred_element_type=jnp.float32)

    x = x_ref[...].astype(jnp.bfloat16)
    h = jnp.tanh(mm(x, w1_ref[...]) + b1_ref[...])                  # (TB, 64) f32
    h = jnp.tanh(mm(h.astype(jnp.bfloat16), w2_ref[...]) + b2_ref[...])
    h16 = h.astype(jnp.bfloat16)                                    # (TB, 64) bf16

    # K-chunked head: the full (TB, 1024) ReLU activation never hits VMEM.
    acc = jnp.zeros(q_ref.shape, jnp.float32)                       # (TB, 128)
    width = wh_ref.shape[1]
    for lo in range(0, width, HEAD_CHUNK):                          # static, unrolled
        hi = min(lo + HEAD_CHUNK, width)
        hh = jnp.maximum(mm(h16, wh_ref[:, lo:hi]) + bh_ref[:, lo:hi], 0.0)
        acc = acc + mm(hh.astype(jnp.bfloat16), wq_ref[lo:hi, :])
    q_ref[...] = (acc + bq_ref[...]).astype(q_ref.dtype)


# --------------------------------------------------------------------------
# Parameter packing (all fusion / padding happens here, once).
# --------------------------------------------------------------------------
def pack_params(params, action_dim):
    a_pad = _round_up(action_dim, LANE)

    # Fold the dueling combine: q = v + a - mean(a) is invariant to shifting
    # every row of wa2 by its row-mean, and v broadcasts across columns.
    wa2_c = params["wa2"] - jnp.mean(params["wa2"], axis=1, keepdims=True)
    ba2_c = params["ba2"] - jnp.mean(params["ba2"], axis=1, keepdims=True)
    wq = jnp.concatenate(
        [wa2_c, jnp.tile(params["wv2"], (1, action_dim))], axis=0)      # (1024, A)
    wq = jnp.pad(wq, ((0, 0), (0, a_pad - action_dim)))                 # (1024, 128)
    bq = jnp.pad(ba2_c + params["bv2"], ((0, 0), (0, a_pad - action_dim)))

    return {
        "w1": params["w1"].astype(jnp.bfloat16), "b1": params["b1"],
        "w2": params["w2"].astype(jnp.bfloat16), "b2": params["b2"],
        "wh": jnp.concatenate([params["wa1"], params["wv1"]], axis=1
                              ).astype(jnp.bfloat16),                   # (64, 1024)
        "bh": jnp.concatenate([params["ba1"], params["bv1"]], axis=1),  # (1, 1024)
        "wq": wq.astype(jnp.bfloat16),                                  # (1024, 128)
        "bq": bq,                                                       # (1, 128)
    }


# --------------------------------------------------------------------------
# Wrapper: adaptive batch grid, resident weights, lane-dense bf16 output.
# --------------------------------------------------------------------------
def flat_dqfd_forward(x, packed, action_dim, tile_b_max=2048):
    B, d_in = x.shape
    a_pad = packed["wq"].shape[1]

    # Adaptive batch tiling:
    #   * big tiles (<= tile_b_max) amortize the ~0.35 us/grid-step fixed cost,
    #   * tile_b derived from B so padding waste is < MIN_TILE rows per tile,
    #   * >= 2 (even) grid steps when B is large enough so the "parallel" batch
    #     axis can shard across v7x's two TensorCores.
    n_tiles = max(1, pl.cdiv(B, tile_b_max))
    if B >= 2 * MIN_TILE:
        n_tiles = max(n_tiles, 2)
        n_tiles += n_tiles % 2
    tile_b = _round_up(pl.cdiv(B, n_tiles), MIN_TILE)
    b_pad = n_tiles * tile_b
    if b_pad != B:
        x = jnp.pad(x, ((0, b_pad - B), (0, 0)))

    resident = lambda i: (0, 0)   # weights/biases stay pinned in VMEM across the grid
    out = pl.pallas_call(
        flat_dqfd_kernel,
        out_shape=jax.ShapeDtypeStruct((b_pad, a_pad), jnp.bfloat16),
        grid=(n_tiles,),
        in_specs=[
            pl.BlockSpec((tile_b, d_in), lambda i: (i, 0)),
            pl.BlockSpec(packed["w1"].shape, resident),
            pl.BlockSpec(packed["b1"].shape, resident),
            pl.BlockSpec(packed["w2"].shape, resident),
            pl.BlockSpec(packed["b2"].shape, resident),
            pl.BlockSpec(packed["wh"].shape, resident),
            pl.BlockSpec(packed["bh"].shape, resident),
            pl.BlockSpec(packed["wq"].shape, resident),
            pl.BlockSpec(packed["bq"].shape, resident),
        ],
        out_specs=pl.BlockSpec((tile_b, a_pad), lambda i: (i, 0)),
        compiler_params=pltpu.CompilerParams(
            dimension_semantics=("parallel",),       # batch sharded over TCs on v7x
            vmem_limit_bytes=32 * 1024 * 1024,       # actual need ~16 MiB at TB=2048
        ),
    )(x, packed["w1"], packed["b1"], packed["w2"], packed["b2"],
      packed["wh"], packed["bh"], packed["wq"], packed["bq"])

    # TODO(synk): per-env-step path (B~8, one call/step) is weight-DMA + launch
    # bound; a cross-call weight-prefetch future (P10) is not implemented here.
    return out[:B, :action_dim].astype(jnp.float32)


# --------------------------------------------------------------------------
# Parameters + references.
# --------------------------------------------------------------------------
def init_params(key, input_dim, action_dim,
                feat_hidden=FEAT_HIDDEN, duel_hidden=DUEL_HIDDEN):
    """Deterministic synthetic parameters, stored (in, out) so y = x @ W + b."""
    ks = jax.random.split(key, 12)

    def lin(kw, kb, d_in, d_out):
        w = jax.random.normal(kw, (d_in, d_out), jnp.float32) / jnp.sqrt(d_in)
        b = jax.random.normal(kb, (1, d_out), jnp.float32) * 0.01
        return w, b

    p = {}
    p["w1"], p["b1"] = lin(ks[0], ks[1], input_dim, feat_hidden)
    p["w2"], p["b2"] = lin(ks[2], ks[3], feat_hidden, feat_hidden)
    p["wa1"], p["ba1"] = lin(ks[4], ks[5], feat_hidden, duel_hidden)
    p["wa2"], p["ba2"] = lin(ks[6], ks[7], duel_hidden, action_dim)
    p["wv1"], p["bv1"] = lin(ks[8], ks[9], feat_hidden, duel_hidden)
    p["wv2"], p["bv2"] = lin(ks[10], ks[11], duel_hidden, 1)
    return p


def reference_forward(x, params):
    """Original (un-fused, f32) PyTorch forward semantics."""
    dot = functools.partial(jnp.dot, precision=jax.lax.Precision.HIGHEST)
    h = jnp.tanh(dot(x, params["w1"]) + params["b1"])
    h = jnp.tanh(dot(h, params["w2"]) + params["b2"])
    a = dot(jnp.maximum(dot(h, params["wa1"]) + params["ba1"], 0.0),
            params["wa2"]) + params["ba2"]
    v = dot(jnp.maximum(dot(h, params["wv1"]) + params["bv1"], 0.0),
            params["wv2"]) + params["bv2"]
    return v + a - jnp.mean(a, axis=1, keepdims=True)


def fused_reference(x, packed, action_dim):
    """Same fused math as the kernel (incl. bf16 output), in plain XLA."""
    def mm(a, w):
        return jnp.dot(a.astype(jnp.bfloat16), w,
                       preferred_element_type=jnp.float32)
    h = jnp.tanh(mm(x, packed["w1"]) + packed["b1"])
    h = jnp.tanh(mm(h, packed["w2"]) + packed["b2"])
    hh = jnp.maximum(mm(h, packed["wh"]) + packed["bh"], 0.0)
    q = mm(hh, packed["wq"]) + packed["bq"]
    return q.astype(jnp.bfloat16).astype(jnp.float32)[:, :action_dim]


if __name__ == "__main__":
    key = jax.random.PRNGKey(0)
    k_param, k_x = jax.random.split(key)

    batch = 8          # batch of flat observations
    input_dim = 16     # obs_space.shape[0]
    action_dim = 4     # action_space.n

    params = init_params(k_param, input_dim, action_dim)
    packed = pack_params(params, action_dim)
    x = jax.random.normal(k_x, (batch, input_dim), jnp.float32)  # obs_dict['features']

    q = flat_dqfd_forward(x, packed, action_dim)
    q = jax.block_until_ready(q)
    assert q.shape == (batch, action_dim)

    # (1) Kernel vs identical fused math in plain XLA (validates the lowering;
    #     slack covers one bf16 ulp from accumulation-order / rounding flips).
    q_fused = fused_reference(x, packed, action_dim)
    assert jnp.allclose(q, q_fused, atol=2e-2, rtol=2e-2), \
        float(jnp.max(jnp.abs(q - q_fused)))

    # (2) Kernel vs original un-fused f32 module forward (tolerance covers the
    #     bf16 weight storage + bf16 output; the dueling fusion itself is exact).
    q_ref = reference_forward(x, params)
    assert jnp.allclose(q, q_ref, atol=5e-2, rtol=5e-2), \
        float(jnp.max(jnp.abs(q - q_ref)))

    print("KERNEL_OK")
</pallas_src>

<mosaic_0001>
module attributes {stable_mosaic.version = 11 : i64} {
  func.func @flat_dqfd_kernel(%arg0: i32, %arg1: memref<16x16xf32, #tpu.memory_space<vmem>>, %arg2: memref<16x64xbf16, #tpu.memory_space<vmem>>, %arg3: memref<1x64xf32, #tpu.memory_space<vmem>>, %arg4: memref<64x64xbf16, #tpu.memory_space<vmem>>, %arg5: memref<1x64xf32, #tpu.memory_space<vmem>>, %arg6: memref<64x1024xbf16, #tpu.memory_space<vmem>>, %arg7: memref<1x1024xf32, #tpu.memory_space<vmem>>, %arg8: memref<1024x128xbf16, #tpu.memory_space<vmem>>, %arg9: memref<1x128xf32, #tpu.memory_space<vmem>>, %arg10: memref<16x128xbf16, #tpu.memory_space<vmem>>) attributes {dimension_semantics = [#tpu.dimension_semantics<parallel>], iteration_bounds = array<i64: 1>, scalar_prefetch = 0 : i64, scratch_operands = 0 : i64, tpu.core_type = #tpu.core_type<tc>, window_params = [{transform_indices = @transform_0, window_bounds = array<i64: 16, 16>}, {pipeline_mode = #tpu.pipeline_mode<synchronous>, transform_indices = @transform_1, window_bounds = array<i64: 16, 64>}, {pipeline_mode = #tpu.pipeline_mode<synchronous>, transform_indices = @transform_2, window_bounds = array<i64: 1, 64>}, {pipeline_mode = #tpu.pipeline_mode<synchronous>, transform_indices = @transform_3, window_bounds = array<i64: 64, 64>}, {pipeline_mode = #tpu.pipeline_mode<synchronous>, transform_indices = @transform_4, window_bounds = array<i64: 1, 64>}, {pipeline_mode = #tpu.pipeline_mode<synchronous>, transform_indices = @transform_5, window_bounds = array<i64: 64, 1024>}, {pipeline_mode = #tpu.pipeline_mode<synchronous>, transform_indices = @transform_6, window_bounds = array<i64: 1, 1024>}, {pipeline_mode = #tpu.pipeline_mode<synchronous>, transform_indices = @transform_7, window_bounds = array<i64: 1024, 128>}, {pipeline_mode = #tpu.pipeline_mode<synchronous>, transform_indices = @transform_8, window_bounds = array<i64: 1, 128>}, {transform_indices = @transform_9, window_bounds = array<i64: 16, 128>}]} {
    %c0 = arith.constant 0 : index
    %c0_0 = arith.constant 0 : index
    %0 = vector.load %arg1[%c0, %c0_0] : memref<16x16xf32, #tpu.memory_space<vmem>>, vector<16x16xf32>
    %1 = arith.truncf %0 : vector<16x16xf32> to vector<16x16xbf16>
    %c0_1 = arith.constant 0 : index
    %c0_2 = arith.constant 0 : index
    %2 = vector.load %arg2[%c0_1, %c0_2] : memref<16x64xbf16, #tpu.memory_space<vmem>>, vector<16x64xbf16>
    %cst = arith.constant dense<0.000000e+00> : vector<16x64xf32>
    %3 = tpu.matmul %1, %2, %cst {dimension_numbers = #tpu.dot_dimension_numbers<[1], [0], [0], [1], [0, 0, 1, 1], [], []>} : vector<16x16xbf16>, vector<16x64xbf16>, vector<16x64xf32> -> vector<16x64xf32>
    %c0_3 = arith.constant 0 : index
    %c0_4 = arith.constant 0 : index
    %4 = vector.load %arg3[%c0_3, %c0_4] : memref<1x64xf32, #tpu.memory_space<vmem>>, vector<1x64xf32>
    %5 = vector.broadcast %4 : vector<1x64xf32> to vector<16x64xf32>
    %6 = arith.addf %3, %5 : vector<16x64xf32>
    %7 = math.tanh %6 : vector<16x64xf32>
    %8 = arith.truncf %7 : vector<16x64xf32> to vector<16x64xbf16>
    %c0_5 = arith.constant 0 : index
    %c0_6 = arith.constant 0 : index
    %9 = vector.load %arg4[%c0_5, %c0_6] : memref<64x64xbf16, #tpu.memory_space<vmem>>, vector<64x64xbf16>
    %cst_7 = arith.constant dense<0.000000e+00> : vector<16x64xf32>
    %10 = tpu.matmul %8, %9, %cst_7 {dimension_numbers = #tpu.dot_dimension_numbers<[1], [0], [0], [1], [0, 0, 1, 1], [], []>} : vector<16x64xbf16>, vector<64x64xbf16>, vector<16x64xf32> -> vector<16x64xf32>
    %c0_8 = arith.constant 0 : index
    %c0_9 = arith.constant 0 : index
    %11 = vector.load %arg5[%c0_8, %c0_9] : memref<1x64xf32, #tpu.memory_space<vmem>>, vector<1x64xf32>
    %12 = vector.broadcast %11 : vector<1x64xf32> to vector<16x64xf32>
    %13 = arith.addf %10, %12 : vector<16x64xf32>
    %14 = math.tanh %13 : vector<16x64xf32>
    %15 = arith.truncf %14 : vector<16x64xf32> to vector<16x64xbf16>
    %cst_10 = arith.constant 0.000000e+00 : f32
    %16 = vector.broadcast %cst_10 : f32 to vector<16x128xf32>
    %c0_11 = arith.constant 0 : index
    %c0_12 = arith.constant 0 : index
    %17 = vector.load %arg6[%c0_11, %c0_12] : memref<64x1024xbf16, #tpu.memory_space<vmem>>, vector<64x256xbf16>
    %cst_13 = arith.constant dense<0.000000e+00> : vector<16x256xf32>
    %18 = tpu.matmul %15, %17, %cst_13 {dimension_numbers = #tpu.dot_dimension_numbers<[1], [0], [0], [1], [0, 0, 1, 1], [], []>} : vector<16x64xbf16>, vector<64x256xbf16>, vector<16x256xf32> -> vector<16x256xf32>
    %c0_14 = arith.constant 0 : index
    %c0_15 = arith.constant 0 : index
    %19 = vector.load %arg7[%c0_14, %c0_15] : memref<1x1024xf32, #tpu.memory_space<vmem>>, vector<1x256xf32>
    %20 = vector.broadcast %19 : vector<1x256xf32> to vector<16x256xf32>
    %21 = arith.addf %18, %20 : vector<16x256xf32>
    %cst_16 = arith.constant 0.000000e+00 : f32
    %22 = vector.broadcast %cst_16 : f32 to vector<16x256xf32>
    %23 = arith.maximumf %21, %22 : vector<16x256xf32>
    %24 = arith.truncf %23 : vector<16x256xf32> to vector<16x256xbf16>
    %c0_17 = arith.constant 0 : index
    %c0_18 = arith.constant 0 : index
    %25 = vector.load %arg8[%c0_17, %c0_18] : memref<1024x128xbf16, #tpu.memory_space<vmem>>, vector<256x128xbf16>
    %cst_19 = arith.constant dense<0.000000e+00> : vector<16x128xf32>
    %26 = tpu.matmul %24, %25, %cst_19 {dimension_numbers = #tpu.dot_dimension_numbers<[1], [0], [0], [1], [0, 0, 1, 1], [], []>} : vector<16x256xbf16>, vector<256x128xbf16>, vector<16x128xf32> -> vector<16x128xf32>
    %27 = arith.addf %16, %26 : vector<16x128xf32>
    %c0_20 = arith.constant 0 : index
    %c256 = arith.constant 256 : index
    %28 = vector.load %arg6[%c0_20, %c256] : memref<64x1024xbf16, #tpu.memory_space<vmem>>, vector<64x256xbf16>
    %cst_21 = arith.constant dense<0.000000e+00> : vector<16x256xf32>
    %29 = tpu.matmul %15, %28, %cst_21 {dimension_numbers = #tpu.dot_dimension_numbers<[1], [0], [0], [1], [0, 0, 1, 1], [], []>} : vector<16x64xbf16>, vector<64x256xbf16>, vector<16x256xf32> -> vector<16x256xf32>
    %c0_22 = arith.constant 0 : index
    %c256_23 = arith.constant 256 : index
    %30 = vector.load %arg7[%c0_22, %c256_23] : memref<1x1024xf32, #tpu.memory_space<vmem>>, vector<1x256xf32>
    %31 = vector.broadcast %30 : vector<1x256xf32> to vector<16x256xf32>
    %32 = arith.addf %29, %31 : vector<16x256xf32>
    %cst_24 = arith.constant 0.000000e+00 : f32
    %33 = vector.broadcast %cst_24 : f32 to vector<16x256xf32>
    %34 = arith.maximumf %32, %33 : vector<16x256xf32>
    %35 = arith.truncf %34 : vector<16x256xf32> to vector<16x256xbf16>
    %c256_25 = arith.constant 256 : index
    %c0_26 = arith.constant 0 : index
    %36 = vector.load %arg8[%c256_25, %c0_26] : memref<1024x128xbf16, #tpu.memory_space<vmem>>, vector<256x128xbf16>
    %cst_27 = arith.constant dense<0.000000e+00> : vector<16x128xf32>
    %37 = tpu.matmul %35, %36, %cst_27 {dimension_numbers = #tpu.dot_dimension_numbers<[1], [0], [0], [1], [0, 0, 1, 1], [], []>} : vector<16x256xbf16>, vector<256x128xbf16>, vector<16x128xf32> -> vector<16x128xf32>
    %38 = arith.addf %27, %37 : vector<16x128xf32>
    %c0_28 = arith.constant 0 : index
    %c512 = arith.constant 512 : index
    %39 = vector.load %arg6[%c0_28, %c512] : memref<64x1024xbf16, #tpu.memory_space<vmem>>, vector<64x256xbf16>
    %cst_29 = arith.constant dense<0.000000e+00> : vector<16x256xf32>
    %40 = tpu.matmul %15, %39, %cst_29 {dimension_numbers = #tpu.dot_dimension_numbers<[1], [0], [0], [1], [0, 0, 1, 1], [], []>} : vector<16x64xbf16>, vector<64x256xbf16>, vector<16x256xf32> -> vector<16x256xf32>
    %c0_30 = arith.constant 0 : index
    %c512_31 = arith.constant 512 : index
    %41 = vector.load %arg7[%c0_30, %c512_31] : memref<1x1024xf32, #tpu.memory_space<vmem>>, vector<1x256xf32>
    %42 = vector.broadcast %41 : vector<1x256xf32> to vector<16x256xf32>
    %43 = arith.addf %40, %42 : vector<16x256xf32>
    %cst_32 = arith.constant 0.000000e+00 : f32
    %44 = vector.broadcast %cst_32 : f32 to vector<16x256xf32>
    %45 = arith.maximumf %43, %44 : vector<16x256xf32>
    %46 = arith.truncf %45 : vector<16x256xf32> to vector<16x256xbf16>
    %c512_33 = arith.constant 512 : index
    %c0_34 = arith.constant 0 : index
    %47 = vector.load %arg8[%c512_33, %c0_34] : memref<1024x128xbf16, #tpu.memory_space<vmem>>, vector<256x128xbf16>
    %cst_35 = arith.constant dense<0.000000e+00> : vector<16x128xf32>
    %48 = tpu.matmul %46, %47, %cst_35 {dimension_numbers = #tpu.dot_dimension_numbers<[1], [0], [0], [1], [0, 0, 1, 1], [], []>} : vector<16x256xbf16>, vector<256x128xbf16>, vector<16x128xf32> -> vector<16x128xf32>
    %49 = arith.addf %38, %48 : vector<16x128xf32>
    %c0_36 = arith.constant 0 : index
    %c768 = arith.constant 768 : index
    %50 = vector.load %arg6[%c0_36, %c768] : memref<64x1024xbf16, #tpu.memory_space<vmem>>, vector<64x256xbf16>
    %cst_37 = arith.constant dense<0.000000e+00> : vector<16x256xf32>
    %51 = tpu.matmul %15, %50, %cst_37 {dimension_numbers = #tpu.dot_dimension_numbers<[1], [0], [0], [1], [0, 0, 1, 1], [], []>} : vector<16x64xbf16>, vector<64x256xbf16>, vector<16x256xf32> -> vector<16x256xf32>
    %c0_38 = arith.constant 0 : index
    %c768_39 = arith.constant 768 : index
    %52 = vector.load %arg7[%c0_38, %c768_39] : memref<1x1024xf32, #tpu.memory_space<vmem>>, vector<1x256xf32>
    %53 = vector.broadcast %52 : vector<1x256xf32> to vector<16x256xf32>
    %54 = arith.addf %51, %53 : vector<16x256xf32>
    %cst_40 = arith.constant 0.000000e+00 : f32
    %55 = vector.broadcast %cst_40 : f32 to vector<16x256xf32>
    %56 = arith.maximumf %54, %55 : vector<16x256xf32>
    %57 = arith.truncf %56 : vector<16x256xf32> to vector<16x256xbf16>
    %c768_41 = arith.constant 768 : index
    %c0_42 = arith.constant 0 : index
    %58 = vector.load %arg8[%c768_41, %c0_42] : memref<1024x128xbf16, #tpu.memory_space<vmem>>, vector<256x128xbf16>
    %cst_43 = arith.constant dense<0.000000e+00> : vector<16x128xf32>
    %59 = tpu.matmul %57, %58, %cst_43 {dimension_numbers = #tpu.dot_dimension_numbers<[1], [0], [0], [1], [0, 0, 1, 1], [], []>} : vector<16x256xbf16>, vector<256x128xbf16>, vector<16x128xf32> -> vector<16x128xf32>
    %60 = arith.addf %49, %59 : vector<16x128xf32>
    %c0_44 = arith.constant 0 : index
    %c0_45 = arith.constant 0 : index
    %61 = vector.load %arg9[%c0_44, %c0_45] : memref<1x128xf32, #tpu.memory_space<vmem>>, vector<1x128xf32>
    %62 = vector.broadcast %61 : vector<1x128xf32> to vector<16x128xf32>
    %63 = arith.addf %60, %62 : vector<16x128xf32>
    %64 = arith.truncf %63 : vector<16x128xf32> to vector<16x128xbf16>
    %c0_46 = arith.constant 0 : index
    %c0_47 = arith.constant 0 : index
    %65 = vector.load %arg10[%c0_46, %c0_47] : memref<16x128xbf16, #tpu.memory_space<vmem>>, vector<16x128xbf16>
    tpu.vector_store %arg10[%c0_46, %c0_47], %64 {strides = array<i32>} : memref<16x128xbf16, #tpu.memory_space<vmem>>, vector<16x128xbf16>,
    return
  }
  func.func @transform_0(%arg0: i32) -> (i32, i32) {
    %c0_i32 = arith.constant 0 : i32
    %c0_i32_0 = arith.constant 0 : i32
    return %arg0, %c0_i32 : i32, i32
  }
  func.func @transform_1(%arg0: i32) -> (i32, i32) {
    %c0_i32 = arith.constant 0 : i32
    %c0_i32_0 = arith.constant 0 : i32
    %c0_i32_1 = arith.constant 0 : i32
    return %c0_i32, %c0_i32_0 : i32, i32
  }
  func.func @transform_2(%arg0: i32) -> (i32, i32) {
    %c0_i32 = arith.constant 0 : i32
    %c0_i32_0 = arith.constant 0 : i32
    %c0_i32_1 = arith.constant 0 : i32
    return %c0_i32, %c0_i32_0 : i32, i32
  }
  func.func @transform_3(%arg0: i32) -> (i32, i32) {
    %c0_i32 = arith.constant 0 : i32
    %c0_i32_0 = arith.constant 0 : i32
    %c0_i32_1 = arith.constant 0 : i32
    return %c0_i32, %c0_i32_0 : i32, i32
  }
  func.func @transform_4(%arg0: i32) -> (i32, i32) {
    %c0_i32 = arith.constant 0 : i32
    %c0_i32_0 = arith.constant 0 : i32
    %c0_i32_1 = arith.constant 0 : i32
    return %c0_i32, %c0_i32_0 : i32, i32
  }
  func.func @transform_5(%arg0: i32) -> (i32, i32) {
    %c0_i32 = arith.constant 0 : i32
    %c0_i32_0 = arith.constant 0 : i32
    %c0_i32_1 = arith.constant 0 : i32
    return %c0_i32, %c0_i32_0 : i32, i32
  }
  func.func @transform_6(%arg0: i32) -> (i32, i32) {
    %c0_i32 = arith.constant 0 : i32
    %c0_i32_0 = arith.constant 0 : i32
    %c0_i32_1 = arith.constant 0 : i32
    return %c0_i32, %c0_i32_0 : i32, i32
  }
  func.func @transform_7(%arg0: i32) -> (i32, i32) {
    %c0_i32 = arith.constant 0 : i32
    %c0_i32_0 = arith.constant 0 : i32
    %c0_i32_1 = arith.constant 0 : i32
    return %c0_i32, %c0_i32_0 : i32, i32
  }
  func.func @transform_8(%arg0: i32) -> (i32, i32) {
    %c0_i32 = arith.constant 0 : i32
    %c0_i32_0 = arith.constant 0 : i32
    %c0_i32_1 = arith.constant 0 : i32
    return %c0_i32, %c0_i32_0 : i32, i32
  }
  func.func @transform_9(%arg0: i32) -> (i32, i32) {
    %c0_i32 = arith.constant 0 : i32
    %c0_i32_0 = arith.constant 0 : i32
    return %arg0, %c0_i32 : i32, i32
  }
}

</mosaic_0001>

<llo_original>
// kernel: tpu_custom_call.1
$region0: #{tpu_custom_call.1}
  #allocation0 [shape = 'u32[]', space=smem, size = 0x4, offset = 0x4, fixed_abs, tag = 'smem constant byte address 0x4 - core index']
  #allocation1 [shape = 'u32[144,128]{1,0:T(1,128)}', space=vmem, size = 0x12000, scoped, tag = 'internal scratch']
  %s0 = inlined_call_operand.hbm [shape: f32[16,16], index: 0, kind: input, shape index: {}]
  %s1 = inlined_call_operand.hbm [shape: bf16[16,64], index: 1, kind: input, shape index: {}]
  %s2 = inlined_call_operand.vmem [shape: f32[1,64], index: 2, kind: input, shape index: {}]
  %s3 = inlined_call_operand.hbm [shape: bf16[64,64], index: 3, kind: input, shape index: {}]
  %s4 = inlined_call_operand.vmem [shape: f32[1,64], index: 4, kind: input, shape index: {}]
  %s5 = inlined_call_operand.hbm [shape: bf16[64,1024], index: 5, kind: input, shape index: {}]
  %s6 = inlined_call_operand.vmem [shape: f32[1,1024], index: 6, kind: input, shape index: {}]
  %s7 = inlined_call_operand.hbm [shape: bf16[1024,128], index: 7, kind: input, shape index: {}]
  %s8 = inlined_call_operand.vmem [shape: f32[1,128], index: 8, kind: input, shape index: {}]
  %s9 = inlined_call_operand.hbm [shape: bf16[16,128], index: 9, kind: output, shape index: {}]
  %s10 = sld [smem:[#allocation0]]
  $region66: #{tpu_custom_call.1} parent=0
    _
  %s12 = ssub.s32 1, %s10
  %s13 = scalar_select 0, %s12, %s10
  $region1: #{tpu_custom_call.1} parent=0
    #allocation2 [shape = 'u8[8192]{0}', space=vmem, size = 0x2000, scoped, tag = 'input window, operand 0, single buffered']
    #allocation3 [shape = 's32[1]{0}', space=sflag, size = 0x4, scoped, tag = 'scoped memory for tpu_custom_call.1']
    #allocation4 [shape = 's32[1]{0}', space=sflag, size = 0x4, scoped, tag = 'scoped memory for tpu_custom_call.1']
    #allocation5 [shape = 'u8[4096]{0}', space=vmem, size = 0x1000, scoped, tag = 'input window, operand 1, single buffered']
    #allocation6 [shape = 's32[1]{0}', space=sflag, size = 0x4, scoped, tag = 'scoped memory for tpu_custom_call.1']
    #allocation7 [shape = 'u8[16384]{0}', space=vmem, size = 0x4000, scoped, tag = 'input window, operand 3, single buffered']
    #allocation8 [shape = 'u8[131072]{0}', space=vmem, size = 0x20000, scoped, tag = 'input window, operand 5, single buffered']
    #allocation9 [shape = 's32[1]{0}', space=sflag, size = 0x4, scoped, tag = 'scoped memory for tpu_custom_call.1']
    #allocation10 [shape = 'u8[262144]{0}', space=vmem, size = 0x40000, scoped, tag = 'input window, operand 7, single buffered']
    #allocation11 [shape = 'u8[4096]{0}', space=vmem, size = 0x1000, scoped, tag = 'output window, operand 0, single buffered']
    %14 = vsyncpa [#allocation3], 0
    %15 = vsyncpa [#allocation6], 0
    %16 = vsyncpa [#allocation9], 0
    %17 = vsyncpa [#allocation4], 0
    // Predicated region
    $region2: #{tpu_custom_call.1} parent=1 // pred_check
      _
    $region3: #{tpu_custom_call.1} parent=1 // pred_check_branch
      %19 = sbr.rel (0) target = $region5
    $region4: #{tpu_custom_call.1} parent=1 // pred_region
      %s21 = ssub.s32 256, 256
      %22 = vsyncadd [#allocation3], %s21
      %s23 = sshll.u32 [#allocation2], 4
      %s24 = int_to_ptr.vmem [resolvable:$true] %s23
      %29 = dma.hbm_to_vmem [thread:$0]  %s0, 256, %s24, [#allocation3], 128, 128, 8
    $region5: #{tpu_custom_call.1} parent=1 // pred_fallthru
      _
    // Predicated region
    $region6: #{tpu_custom_call.1} parent=1 // pred_check
      _
    $region7: #{tpu_custom_call.1} parent=1 // pred_check_branch
      %31 = sbr.rel (0) target = $region9
    $region8: #{tpu_custom_call.1} parent=1 // pred_region
      %s33 = ssub.s32 128, 128
      %34 = vsyncadd [#allocation6], %s33
      %s35 = sshll.u32 [#allocation5], 4
      %s36 = int_to_ptr.vmem [resolvable:$true] %s35
      %41 = dma.hbm_to_vmem [thread:$0]  %s1, 128, %s36, [#allocation6], 64, 64, 4
    $region9: #{tpu_custom_call.1} parent=1 // pred_fallthru
      _
    // Predicated region
    $region10: #{tpu_custom_call.1} parent=1 // pred_check
      _
    $region11: #{tpu_custom_call.1} parent=1 // pred_check_branch
      %43 = sbr.rel (0) target = $region13
    $region12: #{tpu_custom_call.1} parent=1 // pred_region
      _
    $region13: #{tpu_custom_call.1} parent=1 // pred_fallthru
      _
    // Predicated region
    $region14: #{tpu_custom_call.1} parent=1 // pred_check
      _
    $region15: #{tpu_custom_call.1} parent=1 // pred_check_branch
      %45 = sbr.rel (0) target = $region17
    $region16: #{tpu_custom_call.1} parent=1 // pred_region
      %s47 = ssub.s32 512, 512
      %48 = vsyncadd [#allocation6], %s47
      %s49 = sshll.u32 [#allocation7], 4
      %s50 = int_to_ptr.vmem [resolvable:$true] %s49
      %55 = dma.hbm_to_vmem [thread:$0]  %s3, 512, %s50, [#allocation6], 64, 64, 4
    $region17: #{tpu_custom_call.1} parent=1 // pred_fallthru
      _
    // Predicated region
    $region18: #{tpu_custom_call.1} parent=1 // pred_check
      _
    $region19: #{tpu_custom_call.1} parent=1 // pred_check_branch
      %57 = sbr.rel (0) target = $region21
    $region20: #{tpu_custom_call.1} parent=1 // pred_region
      _
    $region21: #{tpu_custom_call.1} parent=1 // pred_fallthru
      _
    // Predicated region
    $region22: #{tpu_custom_call.1} parent=1 // pred_check
      _
    $region23: #{tpu_custom_call.1} parent=1 // pred_check_branch
      %59 = sbr.rel (0) target = $region25
    $region24: #{tpu_custom_call.1} parent=1 // pred_region
      %s61 = ssub.s32 4096, 4096
      %62 = vsyncadd [#allocation9], %s61
      %s63 = sshll.u32 [#allocation8], 4
      %s64 = int_to_ptr.vmem [resolvable:$true] %s63
      %69 = dma.hbm_to_vmem [thread:$0]  %s5, 4096, %s64, [#allocation9], 512, 512, 32
    $region25: #{tpu_custom_call.1} parent=1 // pred_fallthru
      _
    // Predicated region
    $region26: #{tpu_custom_call.1} parent=1 // pred_check
      _
    $region27: #{tpu_custom_call.1} parent=1 // pred_check_branch
      %71 = sbr.rel (0) target = $region29
    $region28: #{tpu_custom_call.1} parent=1 // pred_region
      _
    $region29: #{tpu_custom_call.1} parent=1 // pred_fallthru
      _
    // Predicated region
    $region30: #{tpu_custom_call.1} parent=1 // pred_check
      _
    $region31: #{tpu_custom_call.1} parent=1 // pred_check_branch
      %73 = sbr.rel (0) target = $region33
    $region32: #{tpu_custom_call.1} parent=1 // pred_region
      %s75 = ssub.s32 8192, 8192
      %76 = vsyncadd [#allocation9], %s75
      %s77 = sshll.u32 [#allocation10], 4
      %s78 = int_to_ptr.vmem [resolvable:$true] %s77
      %83 = dma.hbm_to_vmem [thread:$0]  %s7, 8192, %s78, [#allocation9], 64, 64, 4
    $region33: #{tpu_custom_call.1} parent=1 // pred_fallthru
      _
    // Predicated region
    $region34: #{tpu_custom_call.1} parent=1 // pred_check
      _
    $region35: #{tpu_custom_call.1} parent=1 // pred_check_branch
      %85 = sbr.rel (0) target = $region37
    $region36: #{tpu_custom_call.1} parent=1 // pred_region
      _
    $region37: #{tpu_custom_call.1} parent=1 // pred_fallthru
      _
    // Predicated region
    $region38: #{tpu_custom_call.1} parent=1 // pred_check
      _
    $region39: #{tpu_custom_call.1} parent=1 // pred_check_branch
      %87 = sbr.rel (0) target = $region41
    $region40: #{tpu_custom_call.1} parent=1 // pred_region
      %88 = dma.done [#allocation3], 256
    $region41: #{tpu_custom_call.1} parent=1 // pred_fallthru
      _
    // Predicated region
    $region42: #{tpu_custom_call.1} parent=1 // pred_check
      _
    $region43: #{tpu_custom_call.1} parent=1 // pred_check_branch
      %90 = sbr.rel (0) target = $region45
    $region44: #{tpu_custom_call.1} parent=1 // pred_region
      %91 = dma.done [#allocation6], 128
    $region45: #{tpu_custom_call.1} parent=1 // pred_fallthru
      _
    // Predicated region
    $region46: #{tpu_custom_call.1} parent=1 // pred_check
      _
    $region47: #{tpu_custom_call.1} parent=1 // pred_check_branch
      %93 = sbr.rel (0) target = $region49
    $region48: #{tpu_custom_call.1} parent=1 // pred_region
      %94 = dma.done [#allocation6], 512
    $region49: #{tpu_custom_call.1} parent=1 // pred_fallthru
      _
    // Predicated region
    $region50: #{tpu_custom_call.1} parent=1 // pred_check
      _
    $region51: #{tpu_custom_call.1} parent=1 // pred_check_branch
      %96 = sbr.rel (0) target = $region53
    $region52: #{tpu_custom_call.1} parent=1 // pred_region
      %97 = dma.done [#allocation9], 4096
    $region53: #{tpu_custom_call.1} parent=1 // pred_fallthru
      _
    // Predicated region
    $region54: #{tpu_custom_call.1} parent=1 // pred_check
      _
    $region55: #{tpu_custom_call.1} parent=1 // pred_check_branch
      %99 = sbr.rel (0) target = $region57
    $region56: #{tpu_custom_call.1} parent=1 // pred_region
      %100 = dma.done [#allocation9], 8192
    $region57: #{tpu_custom_call.1} parent=1 // pred_fallthru
      _
    %v102 = vld [vmem:[#allocation2] sm:$0xff]
    %v103 = vld [vmem:[#allocation2 + $0x8] sm:$0xff]
    %v104 = vpack.c.bf16 %v103, %v102
    %v105 = vld [vmem:[#allocation5] sm:$0xf]
    %v106 = vld [vmem:[#allocation5 + $0x4] sm:$0xf]
    %v107 = vld [vmem:[%s2] sm:$0x1]
    %v109 = vlaneseq
    %v110 = vshrl.u32 %v109, 7
    %v111 = vsub.s32 0, %v110
    %v112 = vrot.slane %v107, %v111
    %v116 = vunpack.c.l.b16 %v105
    %v117 = vunpack.c.l.b16 %v106
    %v118 = vpack.c.b16 %v117, %v116
    %vm120 = vcmask 130048
    %v122 = vsel %vm120, %v104, 0
    %124 = vmatprep.subr.bf16.mxu0 0
    %125 = vmatpush1.bf16.msra.mxu0 0
    %126 = vmatprep.subr.bf16.mxu0 0
    %127 = vmatpush1.bf16.msra.mxu0 0
    %128 = vmatprep.subr.bf16.mxu0 0
    %129 = vmatpush1.bf16.msra.mxu0 0
    %130 = vmatprep.subr.bf16.mxu0 0
    %131 = vmatpush1.bf16.msra.mxu0 0
    %132 = vmatprep.subr.bf16.mxu0 0
    %133 = vmatpush1.bf16.msra.mxu0 0
    %134 = vmatprep.subr.bf16.mxu0 0
    %135 = vmatpush1.bf16.msra.mxu0 0
    %136 = vmatprep.subr.bf16.mxu0 0
    %137 = vmatpush1.bf16.msra.mxu0 0
    %138 = vmatprep.subr.bf16.mxu0 0
    %139 = vmatpush1.bf16.msra.mxu0 %v118
    %140 = vmatprep.subr.bf16.mxu0 0
    %141 = vmatpush2.bf16.msra.mxu0 0
    %142 = vmatprep.subr.bf16.mxu0 0
    %143 = vmatpush2.bf16.msra.mxu0 0
    %144 = vmatprep.subr.bf16.mxu0 0
    %145 = vmatpush2.bf16.msra.mxu0 0
    %146 = vmatprep.subr.bf16.mxu0 0
    %147 = vmatpush2.bf16.msra.mxu0 0
    %148 = vmatprep.subr.bf16.mxu0 0
    %149 = vmatpush2.bf16.msra.mxu0 0
    %150 = vmatprep.subr.bf16.mxu0 0
    %151 = vmatpush2.bf16.msra.mxu0 0
    %152 = vmatprep.subr.bf16.mxu0 0
    %153 = vmatpush2.bf16.msra.mxu0 0
    %154 = vmatprep.subr.bf16.mxu0 0
    %155 = vmatpush2.bf16.msra.mxu0 0
    %156 = vmatprep.mubr.bf16.mxu0 0
    %157 = vmatmul.mubr.bf16.gmra.mxu0 %v122
    %v158 = vpop.f32.mrf.mxu0
    %v159 = vadd.f32 %v112, %v158
    %v160 = vpop.f32.mrf.mxu0
    %v161 = vpop.f32.mrf.mxu0
    %v162 = vadd.f32 %v112, %v161
    %v163 = vpop.f32.mrf.mxu0
    %164 = vdwg.mxu0
    %v165 = vtanh.pop %v159
    %v166 = vtanh.pop %v162
    %v167 = vpack.c.bf16 %v166, %v165
    %v168 = vld [vmem:[#allocation7] sm:$0xf]
    %v169 = vld [vmem:[#allocation7 + $0x4] sm:$0xf]
    %v170 = vld [vmem:[#allocation7 + $0x8] sm:$0xf]
    %v171 = vld [vmem:[#allocation7 + $0xc] sm:$0xf]
    %v172 = vld [vmem:[#allocation7 + $0x10] sm:$0xf]
    %v173 = vld [vmem:[#allocation7 + $0x14] sm:$0xf]
    %v174 = vld [vmem:[#allocation7 + $0x18] sm:$0xf]
    %v175 = vld [vmem:[#allocation7 + $0x1c] sm:$0xf]
    %v176 = vld [vmem:[%s4] sm:$0x1]
    %v178 = vlaneseq
    %v179 = vshrl.u32 %v178, 7
    %v180 = vsub.s32 0, %v179
    %v181 = vrot.slane %v176, %v180
    %v191 = vunpack.c.l.b16 %v168
    %v192 = vunpack.c.l.b16 %v169
    %v193 = vunpack.c.l.b16 %v170
    %v194 = vunpack.c.l.b16 %v171
    %v195 = vunpack.c.l.b16 %v172
    %v196 = vunpack.c.l.b16 %v173
    %v197 = vunpack.c.l.b16 %v174
    %v198 = vunpack.c.l.b16 %v175
    %v199 = vpack.c.b16 %v192, %v191
    %v200 = vpack.c.b16 %v194, %v193
    %v201 = vpack.c.b16 %v196, %v195
    %v202 = vpack.c.b16 %v198, %v197
    %vm207 = vcmask 523264
    %v209 = vsel %vm207, %v167, 0
    %211 = vmatprep.subr.bf16.mxu0 0
    %212 = vmatpush1.bf16.msra.mxu0 0
    %213 = vmatprep.subr.bf16.mxu0 0
    %214 = vmatpush1.bf16.msra.mxu0 0
    %215 = vmatprep.subr.bf16.mxu0 0
    %216 = vmatpush1.bf16.msra.mxu0 0
    %217 = vmatprep.subr.bf16.mxu0 0
    %218 = vmatpush1.bf16.msra.mxu0 0
    %219 = vmatprep.subr.bf16.mxu0 0
    %220 = vmatpush1.bf16.msra.mxu0 %v202
    %221 = vmatprep.subr.bf16.mxu0 0
    %222 = vmatpush1.bf16.msra.mxu0 %v201
    %223 = vmatprep.subr.bf16.mxu0 0
    %224 = vmatpush1.bf16.msra.mxu0 %v200
    %225 = vmatprep.subr.bf16.mxu0 0
    %226 = vmatpush1.bf16.msra.mxu0 %v199
    %227 = vmatprep.subr.bf16.mxu0 0
    %228 = vmatpush2.bf16.msra.mxu0 0
    %229 = vmatprep.subr.bf16.mxu0 0
    %230 = vmatpush2.bf16.msra.mxu0 0
    %231 = vmatprep.subr.bf16.mxu0 0
    %232 = vmatpush2.bf16.msra.mxu0 0
    %233 = vmatprep.subr.bf16.mxu0 0
    %234 = vmatpush2.bf16.msra.mxu0 0
    %235 = vmatprep.subr.bf16.mxu0 0
    %236 = vmatpush2.bf16.msra.mxu0 0
    %237 = vmatprep.subr.bf16.mxu0 0
    %238 = vmatpush2.bf16.msra.mxu0 0
    %239 = vmatprep.subr.bf16.mxu0 0
    %240 = vmatpush2.bf16.msra.mxu0 0
    %241 = vmatprep.subr.bf16.mxu0 0
    %242 = vmatpush2.bf16.msra.mxu0 0
    %243 = vmatprep.mubr.bf16.mxu0 0
    %244 = vmatmul.mubr.bf16.gmra.mxu0 %v209
    %v245 = vpop.f32.mrf.mxu0
    %v246 = vadd.f32 %v181, %v245
    %v247 = vpop.f32.mrf.mxu0
    %v248 = vpop.f32.mrf.mxu0
    %v249 = vadd.f32 %v181, %v248
    %v250 = vpop.f32.mrf.mxu0
    %251 = vdwg.mxu0
    %v252 = vtanh.pop %v246
    %v253 = vtanh.pop %v249
    %v254 = vpack.c.bf16 %v253, %v252
    %v255 = vld [vmem:[#allocation8] sm:$0xff]
    %v256 = vld [vmem:[#allocation8 + $0x20] sm:$0xff]
    %v257 = vld [vmem:[#allocation8 + $0x40] sm:$0xff]
    %v258 = vld [vmem:[#allocation8 + $0x60] sm:$0xff]
    %v259 = vld [vmem:[#allocation8 + $0x80] sm:$0xff]
    %v260 = vld [vmem:[#allocation8 + $0xa0] sm:$0xff]
    %v261 = vld [vmem:[#allocation8 + $0xc0] sm:$0xff]
    %v262 = vld [vmem:[#allocation8 + $0xe0] sm:$0xff]
    %v263 = vld [vmem:[%s6] sm:$0x3]
    %v265 = vlaneseq
    %v266 = vshrl.u32 %v265, 7
    %v267 = vsub.s32 0, %v266
    %v268 = vrot.slane %v263, %v267
    %v269 = vlaneseq
    %v270 = vshrl.u32 %v269, 7
    %v271 = vsub.s32 1, %v270
    %v272 = vrot.slane %v263, %v271
    %v283 = vunpack.c.l.b16 %v255
    %v284 = vunpack.c.h.b16 %v255
    %v285 = vunpack.c.l.b16 %v256
    %v286 = vunpack.c.h.b16 %v256
    %v287 = vunpack.c.l.b16 %v257
    %v288 = vunpack.c.h.b16 %v257
    %v289 = vunpack.c.l.b16 %v258
    %v290 = vunpack.c.h.b16 %v258
    %v291 = vunpack.c.l.b16 %v259
    %v292 = vunpack.c.h.b16 %v259
    %v293 = vunpack.c.l.b16 %v260
    %v294 = vunpack.c.h.b16 %v260
    %v295 = vunpack.c.l.b16 %v261
    %v296 = vunpack.c.h.b16 %v261
    %v297 = vunpack.c.l.b16 %v262
    %v298 = vunpack.c.h.b16 %v262
    %v299 = vpack.c.b16 %v285, %v283
    %v300 = vpack.c.b16 %v286, %v284
    %v301 = vpack.c.b16 %v289, %v287
    %v302 = vpack.c.b16 %v290, %v288
    %v303 = vpack.c.b16 %v293, %v291
    %v304 = vpack.c.b16 %v294, %v292
    %v305 = vpack.c.b16 %v297, %v295
    %v306 = vpack.c.b16 %v298, %v296
    %v316 = vsel %vm207, %v254, 0
    %318 = vmatprep.subr.bf16.mxu0 0
    %319 = vmatpush1.bf16.msra.mxu0 0
    %320 = vmatprep.subr.bf16.mxu0 0
    %321 = vmatpush1.bf16.msra.mxu0 0
    %322 = vmatprep.subr.bf16.mxu0 0
    %323 = vmatpush1.bf16.msra.mxu0 0
    %324 = vmatprep.subr.bf16.mxu0 0
    %325 = vmatpush1.bf16.msra.mxu0 0
    %326 = vmatprep.subr.bf16.mxu0 %v306
    %327 = vmatpush1.bf16.msra.mxu0 %v305
    %328 = vmatprep.subr.bf16.mxu0 %v304
    %329 = vmatpush1.bf16.msra.mxu0 %v303
    %330 = vmatprep.subr.bf16.mxu0 %v302
    %331 = vmatpush1.bf16.msra.mxu0 %v301
    %332 = vmatprep.subr.bf16.mxu0 %v300
    %333 = vmatpush1.bf16.msra.mxu0 %v299
    %334 = vmatprep.subr.bf16.mxu0 0
    %335 = vmatpush2.bf16.msra.mxu0 0
    %336 = vmatprep.subr.bf16.mxu0 0
    %337 = vmatpush2.bf16.msra.mxu0 0
    %338 = vmatprep.subr.bf16.mxu0 0
    %339 = vmatpush2.bf16.msra.mxu0 0
    %340 = vmatprep.subr.bf16.mxu0 0
    %341 = vmatpush2.bf16.msra.mxu0 0
    %342 = vmatprep.subr.bf16.mxu0 0
    %343 = vmatpush2.bf16.msra.mxu0 0
    %344 = vmatprep.subr.bf16.mxu0 0
    %345 = vmatpush2.bf16.msra.mxu0 0
    %346 = vmatprep.subr.bf16.mxu0 0
    %347 = vmatpush2.bf16.msra.mxu0 0
    %348 = vmatprep.subr.bf16.mxu0 0
    %349 = vmatpush2.bf16.msra.mxu0 0
    %350 = vmatprep.mubr.bf16.mxu0 0
    %351 = vmatmul.mubr.bf16.gmra.mxu0 %v316
    %v352 = vpop.f32.mrf.mxu0
    %v353 = vadd.f32 %v268, %v352
    %v354 = vpop.f32.mrf.mxu0
    %v355 = vadd.f32 %v272, %v354
    %v356 = vpop.f32.mrf.mxu0
    %v357 = vadd.f32 %v268, %v356
    %v358 = vpop.f32.mrf.mxu0
    %v359 = vadd.f32 %v272, %v358
    %360 = vdwg.mxu0
    %v361 = vmax.f32 %v353, 0.0
    %v362 = vmax.f32 %v355, 0.0
    %v363 = vmax.f32 %v357, 0.0
    %v364 = vmax.f32 %v359, 0.0
    %v365 = vpack.c.bf16 %v363, %v361
    %v366 = vpack.c.bf16 %v364, %v362
    %v367 = vld [vmem:[#allocation10] sm:$0xf]
    %v368 = vld [vmem:[#allocation10 + $0x4] sm:$0xf]
    %v369 = vld [vmem:[#allocation10 + $0x8] sm:$0xf]
    %v370 = vld [vmem:[#allocation10 + $0xc] sm:$0xf]
    %v371 = vld [vmem:[#allocation10 + $0x10] sm:$0xf]
    %v372 = vld [vmem:[#allocation10 + $0x14] sm:$0xf]
    %v373 = vld [vmem:[#allocation10 + $0x18] sm:$0xf]
    %v374 = vld [vmem:[#allocation10 + $0x1c] sm:$0xf]
    %v375 = vld [vmem:[#allocation10 + $0x20] sm:$0xf]
    %v376 = vld [vmem:[#allocation10 + $0x24] sm:$0xf]
    %v377 = vld [vmem:[#allocation10 + $0x28] sm:$0xf]
    %v378 = vld [vmem:[#allocation10 + $0x2c] sm:$0xf]
    %v379 = vld [vmem:[#allocation10 + $0x30] sm:$0xf]
    %v380 = vld [vmem:[#allocation10 + $0x34] sm:$0xf]
    %v381 = vld [vmem:[#allocation10 + $0x38] sm:$0xf]
    %v382 = vld [vmem:[#allocation10 + $0x3c] sm:$0xf]
    %v383 = vld [vmem:[#allocation10 + $0x40] sm:$0xf]
    %v384 = vld [vmem:[#allocation10 + $0x44] sm:$0xf]
    %v385 = vld [vmem:[#allocation10 + $0x48] sm:$0xf]
    %v386 = vld [vmem:[#allocation10 + $0x4c] sm:$0xf]
    %v387 = vld [vmem:[#allocation10 + $0x50] sm:$0xf]
    %v388 = vld [vmem:[#allocation10 + $0x54] sm:$0xf]
    %v389 = vld [vmem:[#allocation10 + $0x58] sm:$0xf]
    %v390 = vld [vmem:[#allocation10 + $0x5c] sm:$0xf]
    %v391 = vld [vmem:[#allocation10 + $0x60] sm:$0xf]
    %v392 = vld [vmem:[#allocation10 + $0x64] sm:$0xf]
    %v393 = vld [vmem:[#allocation10 + $0x68] sm:$0xf]
    %v394 = vld [vmem:[#allocation10 + $0x6c] sm:$0xf]
    %v395 = vld [vmem:[#allocation10 + $0x70] sm:$0xf]
    %v396 = vld [vmem:[#allocation10 + $0x74] sm:$0xf]
    %v397 = vld [vmem:[#allocation10 + $0x78] sm:$0xf]
    %v398 = vld [vmem:[#allocation10 + $0x7c] sm:$0xf]
    %v399 = vld [vmem:[#allocation8 + $0x8] sm:$0xff]
    %v400 = vld [vmem:[#allocation8 + $0x28] sm:$0xff]
    %v401 = vld [vmem:[#allocation8 + $0x48] sm:$0xff]
    %v402 = vld [vmem:[#allocation8 + $0x68] sm:$0xff]
    %v403 = vld [vmem:[#allocation8 + $0x88] sm:$0xff]
    %v404 = vld [vmem:[#allocation8 + $0xa8] sm:$0xff]
    %v405 = vld [vmem:[#allocation8 + $0xc8] sm:$0xff]
    %v406 = vld [vmem:[#allocation8 + $0xe8] sm:$0xff]
    %v407 = vld [vmem:[%s6 + $0x2] sm:$0x3]
    %v409 = vlaneseq
    %v410 = vshrl.u32 %v409, 7
    %v411 = vsub.s32 0, %v410
    %v412 = vrot.slane %v407, %v411
    %v413 = vlaneseq
    %v414 = vshrl.u32 %v413, 7
    %v415 = vsub.s32 1, %v414
    %v416 = vrot.slane %v407, %v415
    %v427 = vunpack.c.l.b16 %v399
    %v428 = vunpack.c.h.b16 %v399
    %v429 = vunpack.c.l.b16 %v400
    %v430 = vunpack.c.h.b16 %v400
    %v431 = vunpack.c.l.b16 %v401
    %v432 = vunpack.c.h.b16 %v401
    %v433 = vunpack.c.l.b16 %v402
    %v434 = vunpack.c.h.b16 %v402
    %v435 = vunpack.c.l.b16 %v403
    %v436 = vunpack.c.h.b16 %v403
    %v437 = vunpack.c.l.b16 %v404
    %v438 = vunpack.c.h.b16 %v404
    %v439 = vunpack.c.l.b16 %v405
    %v440 = vunpack.c.h.b16 %v405
    %v441 = vunpack.c.l.b16 %v406
    %v442 = vunpack.c.h.b16 %v406
    %v443 = vpack.c.b16 %v429, %v427
    %v444 = vpack.c.b16 %v430, %v428
    %v445 = vpack.c.b16 %v433, %v431
    %v446 = vpack.c.b16 %v434, %v432
    %v447 = vpack.c.b16 %v437, %v435
    %v448 = vpack.c.b16 %v438, %v436
    %v449 = vpack.c.b16 %v441, %v439
    %v450 = vpack.c.b16 %v442, %v440
    %459 = vmatprep.subr.bf16.mxu0 0
    %460 = vmatpush1.bf16.msra.mxu0 0
    %461 = vmatprep.subr.bf16.mxu0 0
    %462 = vmatpush1.bf16.msra.mxu0 0
    %463 = vmatprep.subr.bf16.mxu0 0
    %464 = vmatpush1.bf16.msra.mxu0 0
    %465 = vmatprep.subr.bf16.mxu0 0
    %466 = vmatpush1.bf16.msra.mxu0 0
    %467 = vmatprep.subr.bf16.mxu0 %v450
    %468 = vmatpush1.bf16.msra.mxu0 %v449
    %469 = vmatprep.subr.bf16.mxu0 %v448
    %470 = vmatpush1.bf16.msra.mxu0 %v447
    %471 = vmatprep.subr.bf16.mxu0 %v446
    %472 = vmatpush1.bf16.msra.mxu0 %v445
    %473 = vmatprep.subr.bf16.mxu0 %v444
    %474 = vmatpush1.bf16.msra.mxu0 %v443
    %475 = vmatprep.subr.bf16.mxu0 0
    %476 = vmatpush2.bf16.msra.mxu0 0
    %477 = vmatprep.subr.bf16.mxu0 0
    %478 = vmatpush2.bf16.msra.mxu0 0
    %479 = vmatprep.subr.bf16.mxu0 0
    %480 = vmatpush2.bf16.msra.mxu0 0
    %481 = vmatprep.subr.bf16.mxu0 0
    %482 = vmatpush2.bf16.msra.mxu0 0
    %483 = vmatprep.subr.bf16.mxu0 0
    %484 = vmatpush2.bf16.msra.mxu0 0
    %485 = vmatprep.subr.bf16.mxu0 0
    %486 = vmatpush2.bf16.msra.mxu0 0
    %487 = vmatprep.subr.bf16.mxu0 0
    %488 = vmatpush2.bf16.msra.mxu0 0
    %489 = vmatprep.subr.bf16.mxu0 0
    %490 = vmatpush2.bf16.msra.mxu0 0
    %491 = vmatprep.mubr.bf16.mxu0 0
    %492 = vmatmul.mubr.bf16.gmra.mxu0 %v316
    %v493 = vpop.f32.mrf.mxu0
    %v494 = vadd.f32 %v412, %v493
    %v495 = vpop.f32.mrf.mxu0
    %v496 = vadd.f32 %v416, %v495
    %v497 = vpop.f32.mrf.mxu0
    %v498 = vadd.f32 %v412, %v497
    %v499 = vpop.f32.mrf.mxu0
    %v500 = vadd.f32 %v416, %v499
    %501 = vdwg.mxu0
    %v502 = vmax.f32 %v494, 0.0
    %v503 = vmax.f32 %v496, 0.0
    %v504 = vmax.f32 %v498, 0.0
    %v505 = vmax.f32 %v500, 0.0
    %v506 = vpack.c.bf16 %v504, %v502
    %v507 = vpack.c.bf16 %v505, %v503
    %v508 = vld [vmem:[#allocation10 + $0x80] sm:$0xf]
    %v509 = vld [vmem:[#allocation10 + $0x84] sm:$0xf]
    %v510 = vld [vmem:[#allocation10 + $0x88] sm:$0xf]
    %v511 = vld [vmem:[#allocation10 + $0x8c] sm:$0xf]
    %v512 = vld [vmem:[#allocation10 + $0x90] sm:$0xf]
    %v513 = vld [vmem:[#allocation10 + $0x94] sm:$0xf]
    %v514 = vld [vmem:[#allocation10 + $0x98] sm:$0xf]
    %v515 = vld [vmem:[#allocation10 + $0x9c] sm:$0xf]
    %v516 = vld [vmem:[#allocation10 + $0xa0] sm:$0xf]
    %v517 = vld [vmem:[#allocation10 + $0xa4] sm:$0xf]
    %v518 = vld [vmem:[#allocation10 + $0xa8] sm:$0xf]
    %v519 = vld [vmem:[#allocation10 + $0xac] sm:$0xf]
    %v520 = vld [vmem:[#allocation10 + $0xb0] sm:$0xf]
    %v521 = vld [vmem:[#allocation10 + $0xb4] sm:$0xf]
    %v522 = vld [vmem:[#allocation10 + $0xb8] sm:$0xf]
    %v523 = vld [vmem:[#allocation10 + $0xbc] sm:$0xf]
    %v524 = vld [vmem:[#allocation10 + $0xc0] sm:$0xf]
    %v525 = vld [vmem:[#allocation10 + $0xc4] sm:$0xf]
    %v526 = vld [vmem:[#allocation10 + $0xc8] sm:$0xf]
    %v527 = vld [vmem:[#allocation10 + $0xcc] sm:$0xf]
    %v528 = vld [vmem:[#allocation10 + $0xd0] sm:$0xf]
    %v529 = vld [vmem:[#allocation10 + $0xd4] sm:$0xf]
    %v530 = vld [vmem:[#allocation10 + $0xd8] sm:$0xf]
    %v531 = vld [vmem:[#allocation10 + $0xdc] sm:$0xf]
    %v532 = vld [vmem:[#allocation10 + $0xe0] sm:$0xf]
    %v533 = vld [vmem:[#allocation10 + $0xe4] sm:$0xf]
    %v534 = vld [vmem:[#allocation10 + $0xe8] sm:$0xf]
    %v535 = vld [vmem:[#allocation10 + $0xec] sm:$0xf]
    %v536 = vld [vmem:[#allocation10 + $0xf0] sm:$0xf]
    %v537 = vld [vmem:[#allocation10 + $0xf4] sm:$0xf]
    %v538 = vld [vmem:[#allocation10 + $0xf8] sm:$0xf]
    %v539 = vld [vmem:[#allocation10 + $0xfc] sm:$0xf]
    %v572 = vunpack.c.l.b16 %v508
    %v573 = vunpack.c.l.b16 %v509
    %v574 = vunpack.c.l.b16 %v510
    %v575 = vunpack.c.l.b16 %v511
    %v576 = vunpack.c.l.b16 %v512
    %v577 = vunpack.c.l.b16 %v513
    %v578 = vunpack.c.l.b16 %v514
    %v579 = vunpack.c.l.b16 %v515
    %v580 = vunpack.c.l.b16 %v516
    %v581 = vunpack.c.l.b16 %v517
    %v582 = vunpack.c.l.b16 %v518
    %v583 = vunpack.c.l.b16 %v519
    %v584 = vunpack.c.l.b16 %v520
    %v585 = vunpack.c.l.b16 %v521
    %v586 = vunpack.c.l.b16 %v522
    %v587 = vunpack.c.l.b16 %v523
    %v588 = vunpack.c.l.b16 %v524
    %v589 = vunpack.c.l.b16 %v525
    %v590 = vunpack.c.l.b16 %v526
    %v591 = vunpack.c.l.b16 %v527
    %v592 = vunpack.c.l.b16 %v528
    %v593 = vunpack.c.l.b16 %v529
    %v594 = vunpack.c.l.b16 %v530
    %v595 = vunpack.c.l.b16 %v531
    %v596 = vunpack.c.l.b16 %v532
    %v597 = vunpack.c.l.b16 %v533
    %v598 = vunpack.c.l.b16 %v534
    %v599 = vunpack.c.l.b16 %v535
    %v600 = vunpack.c.l.b16 %v536
    %v601 = vunpack.c.l.b16 %v537
    %v602 = vunpack.c.l.b16 %v538
    %v603 = vunpack.c.l.b16 %v539
    %v604 = vpack.c.b16 %v573, %v572
    %v605 = vpack.c.b16 %v575, %v574
    %v606 = vpack.c.b16 %v577, %v576
    %v607 = vpack.c.b16 %v579, %v578
    %v608 = vpack.c.b16 %v581, %v580
    %v609 = vpack.c.b16 %v583, %v582
    %v610 = vpack.c.b16 %v585, %v584
    %v611 = vpack.c.b16 %v587, %v586
    %v612 = vpack.c.b16 %v589, %v588
    %v613 = vpack.c.b16 %v591, %v590
    %v614 = vpack.c.b16 %v593, %v592
    %v615 = vpack.c.b16 %v595, %v594
    %v616 = vpack.c.b16 %v597, %v596
    %v617 = vpack.c.b16 %v599, %v598
    %v618 = vpack.c.b16 %v601, %v600
    %v619 = vpack.c.b16 %v603, %v602
    %636 = vmatprep.subr.bf16.mxu0 0
    %637 = vmatpush1.bf16.msra.mxu0 %v611
    %638 = vmatprep.subr.bf16.mxu0 0
    %639 = vmatpush1.bf16.msra.mxu0 %v610
    %640 = vmatprep.subr.bf16.mxu0 0
    %641 = vmatpush1.bf16.msra.mxu0 %v609
    %642 = vmatprep.subr.bf16.mxu0 0
    %643 = vmatpush1.bf16.msra.mxu0 %v608
    %644 = vmatprep.subr.bf16.mxu0 0
    %645 = vmatpush1.bf16.msra.mxu0 %v607
    %646 = vmatprep.subr.bf16.mxu0 0
    %647 = vmatpush1.bf16.msra.mxu0 %v606
    %648 = vmatprep.subr.bf16.mxu0 0
    %649 = vmatpush1.bf16.msra.mxu0 %v605
    %650 = vmatprep.subr.bf16.mxu0 0
    %651 = vmatpush1.bf16.msra.mxu0 %v604
    %652 = vmatprep.subr.bf16.mxu0 0
    %653 = vmatpush2.bf16.msra.mxu0 %v619
    %654 = vmatprep.subr.bf16.mxu0 0
    %655 = vmatpush2.bf16.msra.mxu0 %v618
    %656 = vmatprep.subr.bf16.mxu0 0
    %657 = vmatpush2.bf16.msra.mxu0 %v617
    %658 = vmatprep.subr.bf16.mxu0 0
    %659 = vmatpush2.bf16.msra.mxu0 %v616
    %660 = vmatprep.subr.bf16.mxu0 0
    %661 = vmatpush2.bf16.msra.mxu0 %v615
    %662 = vmatprep.subr.bf16.mxu0 0
    %663 = vmatpush2.bf16.msra.mxu0 %v614
    %664 = vmatprep.subr.bf16.mxu0 0
    %665 = vmatpush2.bf16.msra.mxu0 %v613
    %666 = vmatprep.subr.bf16.mxu0 0
    %667 = vmatpush2.bf16.msra.mxu0 %v612
    %668 = vmatprep.mubr.bf16.mxu0 %v507
    %669 = vmatmul.mubr.bf16.gmra.mxu0 %v506
    %v670 = vpop.f32.mrf.mxu0
    %v671 = vadd.f32 0.0, %v670
    %v672 = vpop.f32.mrf.mxu0
    %v673 = vpop.f32.mrf.mxu0
    %v674 = vadd.f32 0.0, %v673
    %v675 = vpop.f32.mrf.mxu0
    %676 = vdwg.mxu0
    %v709 = vunpack.c.l.b16 %v367
    %v710 = vunpack.c.l.b16 %v368
    %v711 = vunpack.c.l.b16 %v369
    %v712 = vunpack.c.l.b16 %v370
    %v713 = vunpack.c.l.b16 %v371
    %v714 = vunpack.c.l.b16 %v372
    %v715 = vunpack.c.l.b16 %v373
    %v716 = vunpack.c.l.b16 %v374
    %v717 = vunpack.c.l.b16 %v375
    %v718 = vunpack.c.l.b16 %v376
    %v719 = vunpack.c.l.b16 %v377
    %v720 = vunpack.c.l.b16 %v378
    %v721 = vunpack.c.l.b16 %v379
    %v722 = vunpack.c.l.b16 %v380
    %v723 = vunpack.c.l.b16 %v381
    %v724 = vunpack.c.l.b16 %v382
    %v725 = vunpack.c.l.b16 %v383
    %v726 = vunpack.c.l.b16 %v384
    %v727 = vunpack.c.l.b16 %v385
    %v728 = vunpack.c.l.b16 %v386
    %v729 = vunpack.c.l.b16 %v387
    %v730 = vunpack.c.l.b16 %v388
    %v731 = vunpack.c.l.b16 %v389
    %v732 = vunpack.c.l.b16 %v390
    %v733 = vunpack.c.l.b16 %v391
    %v734 = vunpack.c.l.b16 %v392
    %v735 = vunpack.c.l.b16 %v393
    %v736 = vunpack.c.l.b16 %v394
    %v737 = vunpack.c.l.b16 %v395
    %v738 = vunpack.c.l.b16 %v396
    %v739 = vunpack.c.l.b16 %v397
    %v740 = vunpack.c.l.b16 %v398
    %v741 = vpack.c.b16 %v710, %v709
    %v742 = vpack.c.b16 %v712, %v711
    %v743 = vpack.c.b16 %v714, %v713
    %v744 = vpack.c.b16 %v716, %v715
    %v745 = vpack.c.b16 %v718, %v717
    %v746 = vpack.c.b16 %v720, %v719
    %v747 = vpack.c.b16 %v722, %v721
    %v748 = vpack.c.b16 %v724, %v723
    %v749 = vpack.c.b16 %v726, %v725
    %v750 = vpack.c.b16 %v728, %v727
    %v751 = vpack.c.b16 %v730, %v729
    %v752 = vpack.c.b16 %v732, %v731
    %v753 = vpack.c.b16 %v734, %v733
    %v754 = vpack.c.b16 %v736, %v735
    %v755 = vpack.c.b16 %v738, %v737
    %v756 = vpack.c.b16 %v740, %v739
    %773 = vmatprep.subr.bf16.mxu0 0
    %774 = vmatpush1.bf16.msra.mxu0 %v748
    %775 = vmatprep.subr.bf16.mxu0 0
    %776 = vmatpush1.bf16.msra.mxu0 %v747
    %777 = vmatprep.subr.bf16.mxu0 0
    %778 = vmatpush1.bf16.msra.mxu0 %v746
    %779 = vmatprep.subr.bf16.mxu0 0
    %780 = vmatpush1.bf16.msra.mxu0 %v745
    %781 = vmatprep.subr.bf16.mxu0 0
    %782 = vmatpush1.bf16.msra.mxu0 %v744
    %783 = vmatprep.subr.bf16.mxu0 0
    %784 = vmatpush1.bf16.msra.mxu0 %v743
    %785 = vmatprep.subr.bf16.mxu0 0
    %786 = vmatpush1.bf16.msra.mxu0 %v742
    %787 = vmatprep.subr.bf16.mxu0 0
    %788 = vmatpush1.bf16.msra.mxu0 %v741
    %789 = vmatprep.subr.bf16.mxu0 0
    %790 = vmatpush2.bf16.msra.mxu0 %v756
    %791 = vmatprep.subr.bf16.mxu0 0
    %792 = vmatpush2.bf16.msra.mxu0 %v755
    %793 = vmatprep.subr.bf16.mxu0 0
    %794 = vmatpush2.bf16.msra.mxu0 %v754
    %795 = vmatprep.subr.bf16.mxu0 0
    %796 = vmatpush2.bf16.msra.mxu0 %v753
    %797 = vmatprep.subr.bf16.mxu0 0
    %798 = vmatpush2.bf16.msra.mxu0 %v752
    %799 = vmatprep.subr.bf16.mxu0 0
    %800 = vmatpush2.bf16.msra.mxu0 %v751
    %801 = vmatprep.subr.bf16.mxu0 0
    %802 = vmatpush2.bf16.msra.mxu0 %v750
    %803 = vmatprep.subr.bf16.mxu0 0
    %804 = vmatpush2.bf16.msra.mxu0 %v749
    %805 = vmatprep.mubr.bf16.mxu0 %v366
    %806 = vmatmul.mubr.bf16.gmra.mxu0 %v365
    %v807 = vpop.f32.mrf.mxu0
    %v808 = vadd.f32 %v671, %v807
    %v809 = vpop.f32.mrf.mxu0
    %v810 = vpop.f32.mrf.mxu0
    %v811 = vadd.f32 %v674, %v810
    %v812 = vpop.f32.mrf.mxu0
    %813 = vdwg.mxu0
    %v814 = vld [vmem:[#allocation8 + $0x10] sm:$0xff]
    %v815 = vld [vmem:[#allocation8 + $0x30] sm:$0xff]
    %v816 = vld [vmem:[#allocation8 + $0x50] sm:$0xff]
    %v817 = vld [vmem:[#allocation8 + $0x70] sm:$0xff]
    %v818 = vld [vmem:[#allocation8 + $0x90] sm:$0xff]
    %v819 = vld [vmem:[#allocation8 + $0xb0] sm:$0xff]
    %v820 = vld [vmem:[#allocation8 + $0xd0] sm:$0xff]
    %v821 = vld [vmem:[#allocation8 + $0xf0] sm:$0xff]
    %v822 = vld [vmem:[%s6 + $0x4] sm:$0x3]
    %v824 = vlaneseq
    %v825 = vshrl.u32 %v824, 7
    %v826 = vsub.s32 0, %v825
    %v827 = vrot.slane %v822, %v826
    %v828 = vlaneseq
    %v829 = vshrl.u32 %v828, 7
    %v830 = vsub.s32 1, %v829
    %v831 = vrot.slane %v822, %v830
    %v842 = vunpack.c.l.b16 %v814
    %v843 = vunpack.c.h.b16 %v814
    %v844 = vunpack.c.l.b16 %v815
    %v845 = vunpack.c.h.b16 %v815
    %v846 = vunpack.c.l.b16 %v816
    %v847 = vunpack.c.h.b16 %v816
    %v848 = vunpack.c.l.b16 %v817
    %v849 = vunpack.c.h.b16 %v817
    %v850 = vunpack.c.l.b16 %v818
    %v851 = vunpack.c.h.b16 %v818
    %v852 = vunpack.c.l.b16 %v819
    %v853 = vunpack.c.h.b16 %v819
    %v854 = vunpack.c.l.b16 %v820
    %v855 = vunpack.c.h.b16 %v820
    %v856 = vunpack.c.l.b16 %v821
    %v857 = vunpack.c.h.b16 %v821
    %v858 = vpack.c.b16 %v844, %v842
    %v859 = vpack.c.b16 %v845, %v843
    %v860 = vpack.c.b16 %v848, %v846
    %v861 = vpack.c.b16 %v849, %v847
    %v862 = vpack.c.b16 %v852, %v850
    %v863 = vpack.c.b16 %v853, %v851
    %v864 = vpack.c.b16 %v856, %v854
    %v865 = vpack.c.b16 %v857, %v855
    %874 = vmatprep.subr.bf16.mxu0 0
    %875 = vmatpush1.bf16.msra.mxu0 0
    %876 = vmatprep.subr.bf16.mxu0 0
    %877 = vmatpush1.bf16.msra.mxu0 0
    %878 = vmatprep.subr.bf16.mxu0 0
    %879 = vmatpush1.bf16.msra.mxu0 0
    %880 = vmatprep.subr.bf16.mxu0 0
    %881 = vmatpush1.bf16.msra.mxu0 0
    %882 = vmatprep.subr.bf16.mxu0 %v865
    %883 = vmatpush1.bf16.msra.mxu0 %v864
    %884 = vmatprep.subr.bf16.mxu0 %v863
    %885 = vmatpush1.bf16.msra.mxu0 %v862
    %886 = vmatprep.subr.bf16.mxu0 %v861
    %887 = vmatpush1.bf16.msra.mxu0 %v860
    %888 = vmatprep.subr.bf16.mxu0 %v859
    %889 = vmatpush1.bf16.msra.mxu0 %v858
    %890 = vmatprep.subr.bf16.mxu0 0
    %891 = vmatpush2.bf16.msra.mxu0 0
    %892 = vmatprep.subr.bf16.mxu0 0
    %893 = vmatpush2.bf16.msra.mxu0 0
    %894 = vmatprep.subr.bf16.mxu0 0
    %895 = vmatpush2.bf16.msra.mxu0 0
    %896 = vmatprep.subr.bf16.mxu0 0
    %897 = vmatpush2.bf16.msra.mxu0 0
    %898 = vmatprep.subr.bf16.mxu0 0
    %899 = vmatpush2.bf16.msra.mxu0 0
    %900 = vmatprep.subr.bf16.mxu0 0
    %901 = vmatpush2.bf16.msra.mxu0 0
    %902 = vmatprep.subr.bf16.mxu0 0
    %903 = vmatpush2.bf16.msra.mxu0 0
    %904 = vmatprep.subr.bf16.mxu0 0
    %905 = vmatpush2.bf16.msra.mxu0 0
    %906 = vmatprep.mubr.bf16.mxu0 0
    %907 = vmatmul.mubr.bf16.gmra.mxu0 %v316
    %v908 = vpop.f32.mrf.mxu0
    %v909 = vadd.f32 %v827, %v908
    %v910 = vpop.f32.mrf.mxu0
    %v911 = vadd.f32 %v831, %v910
    %v912 = vpop.f32.mrf.mxu0
    %v913 = vadd.f32 %v827, %v912
    %v914 = vpop.f32.mrf.mxu0
    %v915 = vadd.f32 %v831, %v914
    %916 = vdwg.mxu0
    %v917 = vmax.f32 %v909, 0.0
    %v918 = vmax.f32 %v911, 0.0
    %v919 = vmax.f32 %v913, 0.0
    %v920 = vmax.f32 %v915, 0.0
    %v921 = vpack.c.bf16 %v919, %v917
    %v922 = vpack.c.bf16 %v920, %v918
    %v923 = vld [vmem:[#allocation10 + $0x100] sm:$0xf]
    %v924 = vld [vmem:[#allocation10 + $0x104] sm:$0xf]
    %v925 = vld [vmem:[#allocation10 + $0x108] sm:$0xf]
    %v926 = vld [vmem:[#allocation10 + $0x10c] sm:$0xf]
    %v927 = vld [vmem:[#allocation10 + $0x110] sm:$0xf]
    %v928 = vld [vmem:[#allocation10 + $0x114] sm:$0xf]
    %v929 = vld [vmem:[#allocation10 + $0x118] sm:$0xf]
    %v930 = vld [vmem:[#allocation10 + $0x11c] sm:$0xf]
    %v931 = vld [vmem:[#allocation10 + $0x120] sm:$0xf]
    %v932 = vld [vmem:[#allocation10 + $0x124] sm:$0xf]
    %v933 = vld [vmem:[#allocation10 + $0x128] sm:$0xf]
    %v934 = vld [vmem:[#allocation10 + $0x12c] sm:$0xf]
    %v935 = vld [vmem:[#allocation10 + $0x130] sm:$0xf]
    %v936 = vld [vmem:[#allocation10 + $0x134] sm:$0xf]
    %v937 = vld [vmem:[#allocation10 + $0x138] sm:$0xf]
    %v938 = vld [vmem:[#allocation10 + $0x13c] sm:$0xf]
    %v939 = vld [vmem:[#allocation10 + $0x140] sm:$0xf]
    %v940 = vld [vmem:[#allocation10 + $0x144] sm:$0xf]
    %v941 = vld [vmem:[#allocation10 + $0x148] sm:$0xf]
    %v942 = vld [vmem:[#allocation10 + $0x14c] sm:$0xf]
    %v943 = vld [vmem:[#allocation10 + $0x150] sm:$0xf]
    %v944 = vld [vmem:[#allocation10 + $0x154] sm:$0xf]
    %v945 = vld [vmem:[#allocation10 + $0x158] sm:$0xf]
    %v946 = vld [vmem:[#allocation10 + $0x15c] sm:$0xf]
    %v947 = vld [vmem:[#allocation10 + $0x160] sm:$0xf]
    %v948 = vld [vmem:[#allocation10 + $0x164] sm:$0xf]
    %v949 = vld [vmem:[#allocation10 + $0x168] sm:$0xf]
    %v950 = vld [vmem:[#allocation10 + $0x16c] sm:$0xf]
    %v951 = vld [vmem:[#allocation10 + $0x170] sm:$0xf]
    %v952 = vld [vmem:[#allocation10 + $0x174] sm:$0xf]
    %v953 = vld [vmem:[#allocation10 + $0x178] sm:$0xf]
    %v954 = vld [vmem:[#allocation10 + $0x17c] sm:$0xf]
    %v987 = vunpack.c.l.b16 %v923
    %v988 = vunpack.c.l.b16 %v924
    %v989 = vunpack.c.l.b16 %v925
    %v990 = vunpack.c.l.b16 %v926
    %v991 = vunpack.c.l.b16 %v927
    %v992 = vunpack.c.l.b16 %v928
    %v993 = vunpack.c.l.b16 %v929
    %v994 = vunpack.c.l.b16 %v930
    %v995 = vunpack.c.l.b16 %v931
    %v996 = vunpack.c.l.b16 %v932
    %v997 = vunpack.c.l.b16 %v933
    %v998 = vunpack.c.l.b16 %v934
    %v999 = vunpack.c.l.b16 %v935
    %v1000 = vunpack.c.l.b16 %v936
    %v1001 = vunpack.c.l.b16 %v937
    %v1002 = vunpack.c.l.b16 %v938
    %v1003 = vunpack.c.l.b16 %v939
    %v1004 = vunpack.c.l.b16 %v940
    %v1005 = vunpack.c.l.b16 %v941
    %v1006 = vunpack.c.l.b16 %v942
    %v1007 = vunpack.c.l.b16 %v943
    %v1008 = vunpack.c.l.b16 %v944
    %v1009 = vunpack.c.l.b16 %v945
    %v1010 = vunpack.c.l.b16 %v946
    %v1011 = vunpack.c.l.b16 %v947
    %v1012 = vunpack.c.l.b16 %v948
    %v1013 = vunpack.c.l.b16 %v949
    %v1014 = vunpack.c.l.b16 %v950
    %v1015 = vunpack.c.l.b16 %v951
    %v1016 = vunpack.c.l.b16 %v952
    %v1017 = vunpack.c.l.b16 %v953
    %v1018 = vunpack.c.l.b16 %v954
    %v1019 = vpack.c.b16 %v988, %v987
    %v1020 = vpack.c.b16 %v990, %v989
    %v1021 = vpack.c.b16 %v992, %v991
    %v1022 = vpack.c.b16 %v994, %v993
    %v1023 = vpack.c.b16 %v996, %v995
    %v1024 = vpack.c.b16 %v998, %v997
    %v1025 = vpack.c.b16 %v1000, %v999
    %v1026 = vpack.c.b16 %v1002, %v1001
    %v1027 = vpack.c.b16 %v1004, %v1003
    %v1028 = vpack.c.b16 %v1006, %v1005
    %v1029 = vpack.c.b16 %v1008, %v1007
    %v1030 = vpack.c.b16 %v1010, %v1009
    %v1031 = vpack.c.b16 %v1012, %v1011
    %v1032 = vpack.c.b16 %v1014, %v1013
    %v1033 = vpack.c.b16 %v1016, %v1015
    %v1034 = vpack.c.b16 %v1018, %v1017
    %1051 = vmatprep.subr.bf16.mxu0 0
    %1052 = vmatpush1.bf16.msra.mxu0 %v1026
    %1053 = vmatprep.subr.bf16.mxu0 0
    %1054 = vmatpush1.bf16.msra.mxu0 %v1025
    %1055 = vmatprep.subr.bf16.mxu0 0
    %1056 = vmatpush1.bf16.msra.mxu0 %v1024
    %1057 = vmatprep.subr.bf16.mxu0 0
    %1058 = vmatpush1.bf16.msra.mxu0 %v1023
    %1059 = vmatprep.subr.bf16.mxu0 0
    %1060 = vmatpush1.bf16.msra.mxu0 %v1022
    %1061 = vmatprep.subr.bf16.mxu0 0
    %1062 = vmatpush1.bf16.msra.mxu0 %v1021
    %1063 = vmatprep.subr.bf16.mxu0 0
    %1064 = vmatpush1.bf16.msra.mxu0 %v1020
    %1065 = vmatprep.subr.bf16.mxu0 0
    %1066 = vmatpush1.bf16.msra.mxu0 %v1019
    %1067 = vmatprep.subr.bf16.mxu0 0
    %1068 = vmatpush2.bf16.msra.mxu0 %v1034
    %1069 = vmatprep.subr.bf16.mxu0 0
    %1070 = vmatpush2.bf16.msra.mxu0 %v1033
    %1071 = vmatprep.subr.bf16.mxu0 0
    %1072 = vmatpush2.bf16.msra.mxu0 %v1032
    %1073 = vmatprep.subr.bf16.mxu0 0
    %1074 = vmatpush2.bf16.msra.mxu0 %v1031
    %1075 = vmatprep.subr.bf16.mxu0 0
    %1076 = vmatpush2.bf16.msra.mxu0 %v1030
    %1077 = vmatprep.subr.bf16.mxu0 0
    %1078 = vmatpush2.bf16.msra.mxu0 %v1029
    %1079 = vmatprep.subr.bf16.mxu0 0
    %1080 = vmatpush2.bf16.msra.mxu0 %v1028
    %1081 = vmatprep.subr.bf16.mxu0 0
    %1082 = vmatpush2.bf16.msra.mxu0 %v1027
    %1083 = vmatprep.mubr.bf16.mxu0 %v922
    %1084 = vmatmul.mubr.bf16.gmra.mxu0 %v921
    %v1085 = vpop.f32.mrf.mxu0
    %v1086 = vadd.f32 0.0, %v1085
    %v1087 = vpop.f32.mrf.mxu0
    %v1088 = vpop.f32.mrf.mxu0
    %v1089 = vadd.f32 0.0, %v1088
    %v1090 = vpop.f32.mrf.mxu0
    %1091 = vdwg.mxu0
    %v1092 = vadd.f32 %v808, %v1086
    %v1093 = vadd.f32 %v811, %v1089
    %v1094 = vld [vmem:[#allocation8 + $0x18] sm:$0xff]
    %v1095 = vld [vmem:[#allocation8 + $0x38] sm:$0xff]
    %v1096 = vld [vmem:[#allocation8 + $0x58] sm:$0xff]
    %v1097 = vld [vmem:[#allocation8 + $0x78] sm:$0xff]
    %v1098 = vld [vmem:[#allocation8 + $0x98] sm:$0xff]
    %v1099 = vld [vmem:[#allocation8 + $0xb8] sm:$0xff]
    %v1100 = vld [vmem:[#allocation8 + $0xd8] sm:$0xff]
    %v1101 = vld [vmem:[#allocation8 + $0xf8] sm:$0xff]
    %v1102 = vld [vmem:[%s6 + $0x6] sm:$0x3]
    %v1104 = vlaneseq
    %v1105 = vshrl.u32 %v1104, 7
    %v1106 = vsub.s32 0, %v1105
    %v1107 = vrot.slane %v1102, %v1106
    %v1108 = vlaneseq
    %v1109 = vshrl.u32 %v1108, 7
    %v1110 = vsub.s32 1, %v1109
    %v1111 = vrot.slane %v1102, %v1110
    %v1122 = vunpack.c.l.b16 %v1094
    %v1123 = vunpack.c.h.b16 %v1094
    %v1124 = vunpack.c.l.b16 %v1095
    %v1125 = vunpack.c.h.b16 %v1095
    %v1126 = vunpack.c.l.b16 %v1096
    %v1127 = vunpack.c.h.b16 %v1096
    %v1128 = vunpack.c.l.b16 %v1097
    %v1129 = vunpack.c.h.b16 %v1097
    %v1130 = vunpack.c.l.b16 %v1098
    %v1131 = vunpack.c.h.b16 %v1098
    %v1132 = vunpack.c.l.b16 %v1099
    %v1133 = vunpack.c.h.b16 %v1099
    %v1134 = vunpack.c.l.b16 %v1100
    %v1135 = vunpack.c.h.b16 %v1100
    %v1136 = vunpack.c.l.b16 %v1101
    %v1137 = vunpack.c.h.b16 %v1101
    %v1138 = vpack.c.b16 %v1124, %v1122
    %v1139 = vpack.c.b16 %v1125, %v1123
    %v1140 = vpack.c.b16 %v1128, %v1126
    %v1141 = vpack.c.b16 %v1129, %v1127
    %v1142 = vpack.c.b16 %v1132, %v1130
    %v1143 = vpack.c.b16 %v1133, %v1131
    %v1144 = vpack.c.b16 %v1136, %v1134
    %v1145 = vpack.c.b16 %v1137, %v1135
    %1154 = vmatprep.subr.bf16.mxu0 0
    %1155 = vmatpush1.bf16.msra.mxu0 0
    %1156 = vmatprep.subr.bf16.mxu0 0
    %1157 = vmatpush1.bf16.msra.mxu0 0
    %1158 = vmatprep.subr.bf16.mxu0 0
    %1159 = vmatpush1.bf16.msra.mxu0 0
    %1160 = vmatprep.subr.bf16.mxu0 0
    %1161 = vmatpush1.bf16.msra.mxu0 0
    %1162 = vmatprep.subr.bf16.mxu0 %v1145
    %1163 = vmatpush1.bf16.msra.mxu0 %v1144
    %1164 = vmatprep.subr.bf16.mxu0 %v1143
    %1165 = vmatpush1.bf16.msra.mxu0 %v1142
    %1166 = vmatprep.subr.bf16.mxu0 %v1141
    %1167 = vmatpush1.bf16.msra.mxu0 %v1140
    %1168 = vmatprep.subr.bf16.mxu0 %v1139
    %1169 = vmatpush1.bf16.msra.mxu0 %v1138
    %1170 = vmatprep.subr.bf16.mxu0 0
    %1171 = vmatpush2.bf16.msra.mxu0 0
    %1172 = vmatprep.subr.bf16.mxu0 0
    %1173 = vmatpush2.bf16.msra.mxu0 0
    %1174 = vmatprep.subr.bf16.mxu0 0
    %1175 = vmatpush2.bf16.msra.mxu0 0
    %1176 = vmatprep.subr.bf16.mxu0 0
    %1177 = vmatpush2.bf16.msra.mxu0 0
    %1178 = vmatprep.subr.bf16.mxu0 0
    %1179 = vmatpush2.bf16.msra.mxu0 0
    %1180 = vmatprep.subr.bf16.mxu0 0
    %1181 = vmatpush2.bf16.msra.mxu0 0
    %1182 = vmatprep.subr.bf16.mxu0 0
    %1183 = vmatpush2.bf16.msra.mxu0 0
    %1184 = vmatprep.subr.bf16.mxu0 0
    %1185 = vmatpush2.bf16.msra.mxu0 0
    %1186 = vmatprep.mubr.bf16.mxu0 0
    %1187 = vmatmul.mubr.bf16.gmra.mxu0 %v316
    %v1188 = vpop.f32.mrf.mxu0
    %v1189 = vadd.f32 %v1107, %v1188
    %v1190 = vpop.f32.mrf.mxu0
    %v1191 = vadd.f32 %v1111, %v1190
    %v1192 = vpop.f32.mrf.mxu0
    %v1193 = vadd.f32 %v1107, %v1192
    %v1194 = vpop.f32.mrf.mxu0
    %v1195 = vadd.f32 %v1111, %v1194
    %1196 = vdwg.mxu0
    %v1197 = vmax.f32 %v1189, 0.0
    %v1198 = vmax.f32 %v1191, 0.0
    %v1199 = vmax.f32 %v1193, 0.0
    %v1200 = vmax.f32 %v1195, 0.0
    %v1201 = vpack.c.bf16 %v1199, %v1197
    %v1202 = vpack.c.bf16 %v1200, %v1198
    %v1203 = vld [vmem:[#allocation10 + $0x180] sm:$0xf]
    %v1204 = vld [vmem:[#allocation10 + $0x184] sm:$0xf]
    %v1205 = vld [vmem:[#allocation10 + $0x188] sm:$0xf]
    %v1206 = vld [vmem:[#allocation10 + $0x18c] sm:$0xf]
    %v1207 = vld [vmem:[#allocation10 + $0x190] sm:$0xf]
    %v1208 = vld [vmem:[#allocation10 + $0x194] sm:$0xf]
    %v1209 = vld [vmem:[#allocation10 + $0x198] sm:$0xf]
    %v1210 = vld [vmem:[#allocation10 + $0x19c] sm:$0xf]
    %v1211 = vld [vmem:[#allocation10 + $0x1a0] sm:$0xf]
    %v1212 = vld [vmem:[#allocation10 + $0x1a4] sm:$0xf]
    %v1213 = vld [vmem:[#allocation10 + $0x1a8] sm:$0xf]
    %v1214 = vld [vmem:[#allocation10 + $0x1ac] sm:$0xf]
    %v1215 = vld [vmem:[#allocation10 + $0x1b0] sm:$0xf]
    %v1216 = vld [vmem:[#allocation10 + $0x1b4] sm:$0xf]
    %v1217 = vld [vmem:[#allocation10 + $0x1b8] sm:$0xf]
    %v1218 = vld [vmem:[#allocation10 + $0x1bc] sm:$0xf]
    %v1219 = vld [vmem:[#allocation10 + $0x1c0] sm:$0xf]
    %v1220 = vld [vmem:[#allocation10 + $0x1c4] sm:$0xf]
    %v1221 = vld [vmem:[#allocation10 + $0x1c8] sm:$0xf]
    %v1222 = vld [vmem:[#allocation10 + $0x1cc] sm:$0xf]
    %v1223 = vld [vmem:[#allocation10 + $0x1d0] sm:$0xf]
    %v1224 = vld [vmem:[#allocation10 + $0x1d4] sm:$0xf]
    %v1225 = vld [vmem:[#allocation10 + $0x1d8] sm:$0xf]
    %v1226 = vld [vmem:[#allocation10 + $0x1dc] sm:$0xf]
    %v1227 = vld [vmem:[#allocation10 + $0x1e0] sm:$0xf]
    %v1228 = vld [vmem:[#allocation10 + $0x1e4] sm:$0xf]
    %v1229 = vld [vmem:[#allocation10 + $0x1e8] sm:$0xf]
    %v1230 = vld [vmem:[#allocation10 + $0x1ec] sm:$0xf]
    %v1231 = vld [vmem:[#allocation10 + $0x1f0] sm:$0xf]
    %v1232 = vld [vmem:[#allocation10 + $0x1f4] sm:$0xf]
    %v1233 = vld [vmem:[#allocation10 + $0x1f8] sm:$0xf]
    %v1234 = vld [vmem:[#allocation10 + $0x1fc] sm:$0xf]
    %v1267 = vunpack.c.l.b16 %v1203
    %v1268 = vunpack.c.l.b16 %v1204
    %v1269 = vunpack.c.l.b16 %v1205
    %v1270 = vunpack.c.l.b16 %v1206
    %v1271 = vunpack.c.l.b16 %v1207
    %v1272 = vunpack.c.l.b16 %v1208
    %v1273 = vunpack.c.l.b16 %v1209
    %v1274 = vunpack.c.l.b16 %v1210
    %v1275 = vunpack.c.l.b16 %v1211
    %v1276 = vunpack.c.l.b16 %v1212
    %v1277 = vunpack.c.l.b16 %v1213
    %v1278 = vunpack.c.l.b16 %v1214
    %v1279 = vunpack.c.l.b16 %v1215
    %v1280 = vunpack.c.l.b16 %v1216
    %v1281 = vunpack.c.l.b16 %v1217
    %v1282 = vunpack.c.l.b16 %v1218
    %v1283 = vunpack.c.l.b16 %v1219
    %v1284 = vunpack.c.l.b16 %v1220
    %v1285 = vunpack.c.l.b16 %v1221
    %v1286 = vunpack.c.l.b16 %v1222
    %v1287 = vunpack.c.l.b16 %v1223
    %v1288 = vunpack.c.l.b16 %v1224
    %v1289 = vunpack.c.l.b16 %v1225
    %v1290 = vunpack.c.l.b16 %v1226
    %v1291 = vunpack.c.l.b16 %v1227
    %v1292 = vunpack.c.l.b16 %v1228
    %v1293 = vunpack.c.l.b16 %v1229
    %v1294 = vunpack.c.l.b16 %v1230
    %v1295 = vunpack.c.l.b16 %v1231
    %v1296 = vunpack.c.l.b16 %v1232
    %v1297 = vunpack.c.l.b16 %v1233
    %v1298 = vunpack.c.l.b16 %v1234
    %v1299 = vpack.c.b16 %v1268, %v1267
    %v1300 = vpack.c.b16 %v1270, %v1269
    %v1301 = vpack.c.b16 %v1272, %v1271
    %v1302 = vpack.c.b16 %v1274, %v1273
    %v1303 = vpack.c.b16 %v1276, %v1275
    %v1304 = vpack.c.b16 %v1278, %v1277
    %v1305 = vpack.c.b16 %v1280, %v1279
    %v1306 = vpack.c.b16 %v1282, %v1281
    %v1307 = vpack.c.b16 %v1284, %v1283
    %v1308 = vpack.c.b16 %v1286, %v1285
    %v1309 = vpack.c.b16 %v1288, %v1287
    %v1310 = vpack.c.b16 %v1290, %v1289
    %v1311 = vpack.c.b16 %v1292, %v1291
    %v1312 = vpack.c.b16 %v1294, %v1293
    %v1313 = vpack.c.b16 %v1296, %v1295
    %v1314 = vpack.c.b16 %v1298, %v1297
    %1331 = vmatprep.subr.bf16.mxu0 0
    %1332 = vmatpush1.bf16.msra.mxu0 %v1306
    %1333 = vmatprep.subr.bf16.mxu0 0
    %1334 = vmatpush1.bf16.msra.mxu0 %v1305
    %1335 = vmatprep.subr.bf16.mxu0 0
    %1336 = vmatpush1.bf16.msra.mxu0 %v1304
    %1337 = vmatprep.subr.bf16.mxu0 0
    %1338 = vmatpush1.bf16.msra.mxu0 %v1303
    %1339 = vmatprep.subr.bf16.mxu0 0
    %1340 = vmatpush1.bf16.msra.mxu0 %v1302
    %1341 = vmatprep.subr.bf16.mxu0 0
    %1342 = vmatpush1.bf16.msra.mxu0 %v1301
    %1343 = vmatprep.subr.bf16.mxu0 0
    %1344 = vmatpush1.bf16.msra.mxu0 %v1300
    %1345 = vmatprep.subr.bf16.mxu0 0
    %1346 = vmatpush1.bf16.msra.mxu0 %v1299
    %1347 = vmatprep.subr.bf16.mxu0 0
    %1348 = vmatpush2.bf16.msra.mxu0 %v1314
    %1349 = vmatprep.subr.bf16.mxu0 0
    %1350 = vmatpush2.bf16.msra.mxu0 %v1313
    %1351 = vmatprep.subr.bf16.mxu0 0
    %1352 = vmatpush2.bf16.msra.mxu0 %v1312
    %1353 = vmatprep.subr.bf16.mxu0 0
    %1354 = vmatpush2.bf16.msra.mxu0 %v1311
    %1355 = vmatprep.subr.bf16.mxu0 0
    %1356 = vmatpush2.bf16.msra.mxu0 %v1310
    %1357 = vmatprep.subr.bf16.mxu0 0
    %1358 = vmatpush2.bf16.msra.mxu0 %v1309
    %1359 = vmatprep.subr.bf16.mxu0 0
    %1360 = vmatpush2.bf16.msra.mxu0 %v1308
    %1361 = vmatprep.subr.bf16.mxu0 0
    %1362 = vmatpush2.bf16.msra.mxu0 %v1307
    %1363 = vmatprep.mubr.bf16.mxu0 %v1202
    %1364 = vmatmul.mubr.bf16.gmra.mxu0 %v1201
    %v1365 = vpop.f32.mrf.mxu0
    %v1366 = vadd.f32 0.0, %v1365
    %v1367 = vpop.f32.mrf.mxu0
    %v1368 = vpop.f32.mrf.mxu0
    %v1369 = vadd.f32 0.0, %v1368
    %v1370 = vpop.f32.mrf.mxu0
    %1371 = vdwg.mxu0
    %v1372 = vadd.f32 %v1092, %v1366
    %v1373 = vadd.f32 %v1093, %v1369
    %v1374 = vld [vmem:[%s8] sm:$0x1]
    %v1376 = vlaneseq
    %v1377 = vshrl.u32 %v1376, 7
    %v1378 = vsub.s32 0, %v1377
    %v1379 = vrot.slane %v1374, %v1378
    %v1381 = vadd.f32 %v1372, %v1379
    %v1382 = vadd.f32 %v1373, %v1379
    %v1383 = vpack.c.bf16 %v1382, %v1381
    %v1385 = vunpack.c.l.b16 %v1383
    %v1386 = vunpack.c.h.b16 %v1383
    %v1387 = vpack.c.b16 %v1385, %v1385
    %v1388 = vpack.c.b16 %v1386, %v1386
    %1391 = vst [vmem:[#allocation11] sm:$0xf] %v1387
    %1392 = vst [vmem:[#allocation11 + $0x4] sm:$0xf] %v1388
    // Predicated region
    $region58: #{tpu_custom_call.1} parent=1 // pred_check
      _
    $region59: #{tpu_custom_call.1} parent=1 // pred_check_branch
      %1394 = sbr.rel (0) target = $region61
    $region60: #{tpu_custom_call.1} parent=1 // pred_region
      %s1396 = ssub.s32 128, 128
      %1397 = vsyncadd [#allocation4], %s1396
      %s1398 = sshll.u32 [#allocation11], 4
      %s1399 = int_to_ptr.vmem [resolvable:$true] %s1398
      %1404 = dma.vmem_to_hbm [thread:$0]  %s1399, 128, %s9, [#allocation4], 64, 64, 4
    $region61: #{tpu_custom_call.1} parent=1 // pred_fallthru
      _
    // Predicated region
    $region62: #{tpu_custom_call.1} parent=1 // pred_check
      _
    $region63: #{tpu_custom_call.1} parent=1 // pred_check_branch
      %1406 = sbr.rel (0) target = $region65
    $region64: #{tpu_custom_call.1} parent=1 // pred_region
      %1407 = dma.done [#allocation4], 128
    $region65: #{tpu_custom_call.1} parent=1 // pred_fallthru
      _
    %1408 = vsyncpa [#allocation3], 1
    %1409 = vsyncpa [#allocation6], 1
    %1410 = vsyncpa [#allocation9], 1
    %1411 = vsyncpa [#allocation4], 1

</llo_original>
